<compile_context>
chip_gen: v7x
topology: tpu7x:2x2x1
jax: 0.10.0
libtpu: 0.0.40
codegen_flags: <defaults>
</compile_context>

<pallas_src>
import jax
import jax.numpy as jnp
from jax.experimental import pallas as pl
from jax.experimental.pallas import tpu as pltpu


def als_mlp_kernel(uidx_ref, iidx_ref, utbl_ref, itbl_ref,
                   w1_ref, b1_ref, w2_ref, b2_ref, w3_ref, b3_ref, o_ref):
    tb = o_ref.shape[1]  # batch tile (lanes)

    def gather_t(idx_row, tbl_t):
        # Fused one-hot gather: column b of the result is embedding row idx[b],
        # already transposed to [D, tb].  The MXU has plenty of slack at these
        # shapes and the default f32 dot path keeps full precision (verified vs.
        # jnp.take at 1e-5).  Out-of-range indices yield an all-zero embedding.
        # TODO(synk): DMA-gather path for tables too large to fit in VMEM.
        n_rows = tbl_t.shape[1]
        onehot = jnp.where(
            jax.lax.broadcasted_iota(jnp.int32, (n_rows, tb), 0) == idx_row,
            1.0, 0.0)                                            # [n_rows, tb]
        return jnp.dot(tbl_t, onehot,
                       preferred_element_type=jnp.float32)       # [D, tb]

    def renorm(e):
        # nn.Embedding(max_norm=1): rows with L2 norm > 1 scaled by 1/(norm+1e-7)
        # (matches PyTorch's renorm epsilon exactly).
        norm = jnp.sqrt(jnp.sum(e * e, axis=0, keepdims=True))   # [1, tb]
        return e * jnp.where(norm > 1.0, 1.0 / (norm + 1e-7), 1.0)

    u = renorm(gather_t(uidx_ref[...], utbl_ref[...]))           # [D, tb]
    it = renorm(gather_t(iidx_ref[...], itbl_ref[...]))          # [D, tb]

    # torch.cat([u, i], 1) @ W1 in transposed form: ONE fused [D,2D] x [2D,tb]
    # MXU matmul on the sublane-stacked activations (D % 8 == 0 -> cheap concat).
    ui = jnp.concatenate([u, it], axis=0)                        # [2D, tb]
    h1 = jnp.tanh(jnp.dot(w1_ref[...], ui,
                          preferred_element_type=jnp.float32)
                  + b1_ref[...])                                 # [D, tb]
    h2 = jnp.tanh(jnp.dot(w2_ref[...], h1,
                          preferred_element_type=jnp.float32)
                  + b2_ref[...])                                 # [H2, tb]
    # Final Linear(H2, 1): VPU multiply + XLU sublane reduction (keeps MXU out).
    h3 = jnp.tanh(jnp.sum(h2 * w3_ref[...], axis=0, keepdims=True)
                  + b3_ref[0, 0])                                # [1, tb]
    # F.dropout(training=False) == identity; final sigmoid; lane-dense store.
    o_ref[...] = jax.nn.sigmoid(h3)


def _padded_f32_bytes(shape, bufs):
    """VMEM footprint of an f32 buffer padded to (8, 128) sublane/lane tiles."""
    rows = -(-shape[0] // 8) * 8
    cols = -(-shape[1] // 128) * 128
    return rows * cols * 4 * bufs


def prepare_kernel_params(params):
    """One-time re-layout of the PyTorch-style params into kernel (transposed) form.

    Hoisted out of the forward pass: the table transposes are full HBM relayouts
    and must not be paid on every call.
    """
    users_tbl, items_tbl, w1, b1, w2, b2, w3, b3 = params
    D = users_tbl.shape[1]
    H2 = w2.shape[1]
    return dict(
        utbl_t=users_tbl.T,            # [D, n_users]
        itbl_t=items_tbl.T,            # [D, n_items]
        w1_t=w1.T,                     # [D, 2D]  (full, layer-1 fused)
        b1c=b1.reshape(D, 1),
        w2_t=w2.T,                     # [H2, D]
        b2c=b2.reshape(H2, 1),
        w3c=w3.reshape(H2, 1),
        b3c=b3.reshape(1, 1),
    )


def als_mlp_forward(u_idx, i_idx, kparams, *, tb=256):
    """Full ALS_MLP forward (eval mode), fully fused in one Pallas kernel."""
    utbl_t = kparams["utbl_t"]
    itbl_t = kparams["itbl_t"]
    w1_t = kparams["w1_t"]
    b1c = kparams["b1c"]
    w2_t = kparams["w2_t"]
    b2c = kparams["b2c"]
    w3c = kparams["w3c"]
    b3c = kparams["b3c"]

    D, n_users = utbl_t.shape
    n_items = itbl_t.shape[1]
    H2 = w2_t.shape[0]
    B = u_idx.shape[0]

    tb = min(tb, B)
    assert B % tb == 0, "batch must be a multiple of the batch tile"
    assert tb == B or tb % 128 == 0, "batch tile must be lane-aligned (x128) or == B"

    uidx = u_idx.astype(jnp.int32).reshape(1, B)
    iidx = i_idx.astype(jnp.int32).reshape(1, B)

    grid = (B // tb,)

    cost = pl.CostEstimate(
        flops=(2 * B * D * (n_users + n_items)      # one-hot gather matmuls
               + 2 * B * (2 * D) * D                # fused layer 1
               + 2 * B * D * H2                     # layer 2
               + 2 * B * H2),                       # final dot product
        transcendentals=B * (2 + D + H2 + 1 + 1),   # sqrt x2, tanh, sigmoid
        bytes_accessed=4 * (2 * B                   # indices
                            + (n_users + n_items) * D
                            + 2 * D * D + D + D * H2 + 2 * H2 + 1
                            + B),                   # output
    )

    def build_and_call(single_buffer):
        def const_spec(shape):
            # Grid-invariant block: constant index_map, never re-fetched.
            index_map = lambda b: (0,) * len(shape)
            if single_buffer:
                return pl.BlockSpec(shape, index_map, pipeline_mode=pl.Buffered(1))
            return pl.BlockSpec(shape, index_map)

        invariant_shapes = [(D, n_users), (D, n_items), (D, 2 * D), (D, 1),
                            (H2, D), (H2, 1), (H2, 1)]
        bufs = 1 if single_buffer else 2
        vmem_bytes = sum(_padded_f32_bytes(s, bufs) for s in invariant_shapes)
        vmem_bytes += 3 * _padded_f32_bytes((1, tb), 2)  # idx x2 + output tiles
        vmem_limit = int(min(64 * 1024 * 1024,
                             max(2 * vmem_bytes + (2 << 20), 4 * 1024 * 1024)))

        return pl.pallas_call(
            als_mlp_kernel,
            out_shape=jax.ShapeDtypeStruct((1, B), jnp.float32),
            grid_spec=pltpu.PrefetchScalarGridSpec(
                num_scalar_prefetch=0,
                grid=grid,
                in_specs=[
                    pl.BlockSpec((1, tb), lambda b: (0, b)),       # user indices
                    pl.BlockSpec((1, tb), lambda b: (0, b)),       # item indices
                    const_spec((D, n_users)),                      # users table^T
                    const_spec((D, n_items)),                      # items table^T
                    const_spec((D, 2 * D)),                        # W1^T (fused)
                    const_spec((D, 1)),                            # b1
                    const_spec((H2, D)),                           # W2^T
                    const_spec((H2, 1)),                           # b2
                    const_spec((H2, 1)),                           # W3 (column)
                    pl.BlockSpec(memory_space=pltpu.MemorySpace.SMEM),  # b3 scalar
                ],
                out_specs=pl.BlockSpec((1, tb), lambda b: (0, b)),  # lane-dense out
            ),
            compiler_params=pltpu.CompilerParams(
                dimension_semantics=("parallel",),
                vmem_limit_bytes=vmem_limit),
            cost_estimate=cost,
        )(uidx, iidx, utbl_t, itbl_t, w1_t, b1c, w2_t, b2c, w3c, b3c)

    try:
        out = build_and_call(single_buffer=True)
    except Exception:
        # jax build without pipeline_mode=pl.Buffered support: fall back to the
        # default double-buffering (correctness is identical).
        out = build_and_call(single_buffer=False)

    return out.reshape(B)  # torch.squeeze -> [B]


def init_params(key, n_users, n_items, dim):
    ks = jax.random.split(key, 8)
    users_tbl = jax.random.normal(ks[0], (n_users, dim), jnp.float32)
    items_tbl = jax.random.normal(ks[1], (n_items, dim), jnp.float32)

    # nn.Linear default init: U(-1/sqrt(fan_in), 1/sqrt(fan_in)); stored [in, out].
    def linear(kw, kb, fin, fout):
        bound = 1.0 / jnp.sqrt(fin)
        w = jax.random.uniform(kw, (fin, fout), jnp.float32, -bound, bound)
        b = jax.random.uniform(kb, (fout,), jnp.float32, -bound, bound)
        return w, b

    w1, b1 = linear(ks[2], ks[3], 2 * dim, dim)
    w2, b2 = linear(ks[4], ks[5], dim, dim // 2)
    w3, b3 = linear(ks[6], ks[7], dim // 2, 1)
    return (users_tbl, items_tbl, w1, b1, w2, b2, w3, b3)


def reference_forward(u_idx, i_idx, params):
    """Pure-JAX reference matching the PyTorch semantics (eval mode)."""
    users_tbl, items_tbl, w1, b1, w2, b2, w3, b3 = params

    def renorm(e):
        n = jnp.sqrt(jnp.sum(e * e, axis=-1, keepdims=True))
        return e * jnp.where(n > 1.0, 1.0 / (n + 1e-7), 1.0)

    u = renorm(jnp.take(users_tbl, u_idx, axis=0))
    i = renorm(jnp.take(items_tbl, i_idx, axis=0))
    ui = jnp.concatenate([u, i], axis=1)
    ui = jnp.tanh(ui @ w1 + b1)
    ui = jnp.tanh(ui @ w2 + b2)
    ui = jnp.tanh(ui @ w3 + b3)
    return jax.nn.sigmoid(jnp.squeeze(ui, axis=-1))


if __name__ == "__main__":
    key = jax.random.PRNGKey(0)
    n_users, n_items, dim = 64, 96, 32
    B = 512  # 2 grid steps at tb=256

    kp, ku, ki = jax.random.split(key, 3)
    params = init_params(kp, n_users, n_items, dim)
    kparams = prepare_kernel_params(params)  # one-time re-layout (hoisted out of forward)
    u_idx = jax.random.randint(ku, (B,), 0, n_users)
    i_idx = jax.random.randint(ki, (B,), 0, n_items)

    out = als_mlp_forward(u_idx, i_idx, kparams, tb=256)
    out = jax.block_until_ready(out)

    ref = reference_forward(u_idx, i_idx, params)
    assert out.shape == (B,)
    assert jnp.allclose(out, ref, atol=1e-5, rtol=1e-5), (out, ref)

    print("KERNEL_OK")
</pallas_src>

<mosaic_0001>
module attributes {stable_mosaic.version = 11 : i64} {
  func.func @als_mlp_kernel(%arg0: i32, %arg1: memref<1x256xi32, #tpu.memory_space<vmem>>, %arg2: memref<1x256xi32, #tpu.memory_space<vmem>>, %arg3: memref<32x64xf32, #tpu.memory_space<vmem>>, %arg4: memref<32x96xf32, #tpu.memory_space<vmem>>, %arg5: memref<32x64xf32, #tpu.memory_space<vmem>>, %arg6: memref<32x1xf32, #tpu.memory_space<vmem>>, %arg7: memref<16x32xf32, #tpu.memory_space<vmem>>, %arg8: memref<16x1xf32, #tpu.memory_space<vmem>>, %arg9: memref<16x1xf32, #tpu.memory_space<vmem>>, %arg10: memref<1x1xf32, #tpu.memory_space<smem>>, %arg11: memref<1x256xf32, #tpu.memory_space<vmem>>) attributes {dimension_semantics = [#tpu.dimension_semantics<parallel>], iteration_bounds = array<i64: 2>, scalar_prefetch = 0 : i64, scratch_operands = 0 : i64, tpu.core_type = #tpu.core_type<tc>, window_params = [{transform_indices = @transform_0, window_bounds = array<i64: 1, 256>}, {transform_indices = @transform_1, window_bounds = array<i64: 1, 256>}, {pipeline_mode = #tpu.pipeline_mode<synchronous>, transform_indices = @transform_2, window_bounds = array<i64: 32, 64>}, {pipeline_mode = #tpu.pipeline_mode<synchronous>, transform_indices = @transform_3, window_bounds = array<i64: 32, 96>}, {pipeline_mode = #tpu.pipeline_mode<synchronous>, transform_indices = @transform_4, window_bounds = array<i64: 32, 64>}, {pipeline_mode = #tpu.pipeline_mode<synchronous>, transform_indices = @transform_5, window_bounds = array<i64: 32, 1>}, {pipeline_mode = #tpu.pipeline_mode<synchronous>, transform_indices = @transform_6, window_bounds = array<i64: 16, 32>}, {pipeline_mode = #tpu.pipeline_mode<synchronous>, transform_indices = @transform_7, window_bounds = array<i64: 16, 1>}, {pipeline_mode = #tpu.pipeline_mode<synchronous>, transform_indices = @transform_8, window_bounds = array<i64: 16, 1>}, {transform_indices = @transform_9, window_bounds = array<i64: 1, 1>}, {transform_indices = @transform_10, window_bounds = array<i64: 1, 256>}]} {
    %c0 = arith.constant 0 : index
    %c0_0 = arith.constant 0 : index
    %0 = vector.load %arg1[%c0, %c0_0] : memref<1x256xi32, #tpu.memory_space<vmem>>, vector<1x256xi32>
    %c0_1 = arith.constant 0 : index
    %c0_2 = arith.constant 0 : index
    %1 = vector.load %arg3[%c0_1, %c0_2] : memref<32x64xf32, #tpu.memory_space<vmem>>, vector<32x64xf32>
    %2 = tpu.iota {dimensions = array<i32: 0>} : vector<64x256xi32>
    %3 = vector.broadcast %0 : vector<1x256xi32> to vector<64x256xi32>
    %4 = arith.cmpi eq, %2, %3 : vector<64x256xi32>
    %cst = arith.constant 1.000000e+00 : f32
    %cst_3 = arith.constant 0.000000e+00 : f32
    %5 = vector.broadcast %cst : f32 to vector<64x256xf32>
    %6 = vector.broadcast %cst_3 : f32 to vector<64x256xf32>
    %7 = arith.select %4, %5, %6 : vector<64x256xi1>, vector<64x256xf32>
    %cst_4 = arith.constant dense<0.000000e+00> : vector<32x256xf32>
    %8 = tpu.matmul %1, %7, %cst_4 {dimension_numbers = #tpu.dot_dimension_numbers<[1], [0], [0], [1], [0, 0, 1, 1], [], []>} : vector<32x64xf32>, vector<64x256xf32>, vector<32x256xf32> -> vector<32x256xf32>
    %9 = arith.mulf %8, %8 : vector<32x256xf32>
    %cst_5 = arith.constant dense<0.000000e+00> : vector<256xf32>
    %10 = vector.multi_reduction <add>, %9, %cst_5 [0] : vector<32x256xf32> to vector<256xf32>
    %11 = vector.shape_cast %10 : vector<256xf32> to vector<1x256xf32>
    %12 = math.sqrt %11 : vector<1x256xf32>
    %cst_6 = arith.constant 1.000000e+00 : f32
    %13 = vector.broadcast %cst_6 : f32 to vector<1x256xf32>
    %14 = arith.cmpf ogt, %12, %13 : vector<1x256xf32>
    %cst_7 = arith.constant 1.000000e-07 : f32
    %15 = vector.broadcast %cst_7 : f32 to vector<1x256xf32>
    %16 = arith.addf %12, %15 : vector<1x256xf32>
    %cst_8 = arith.constant 1.000000e+00 : f32
    %17 = vector.broadcast %cst_8 : f32 to vector<1x256xf32>
    %18 = arith.divf %17, %16 : vector<1x256xf32>
    %cst_9 = arith.constant 1.000000e+00 : f32
    %19 = vector.broadcast %cst_9 : f32 to vector<1x256xf32>
    %20 = arith.select %14, %18, %19 : vector<1x256xi1>, vector<1x256xf32>
    %21 = vector.broadcast %20 : vector<1x256xf32> to vector<32x256xf32>
    %22 = arith.mulf %8, %21 : vector<32x256xf32>
    %c0_10 = arith.constant 0 : index
    %c0_11 = arith.constant 0 : index
    %23 = vector.load %arg2[%c0_10, %c0_11] : memref<1x256xi32, #tpu.memory_space<vmem>>, vector<1x256xi32>
    %c0_12 = arith.constant 0 : index
    %c0_13 = arith.constant 0 : index
    %24 = vector.load %arg4[%c0_12, %c0_13] : memref<32x96xf32, #tpu.memory_space<vmem>>, vector<32x96xf32>
    %25 = tpu.iota {dimensions = array<i32: 0>} : vector<96x256xi32>
    %26 = vector.broadcast %23 : vector<1x256xi32> to vector<96x256xi32>
    %27 = arith.cmpi eq, %25, %26 : vector<96x256xi32>
    %cst_14 = arith.constant 1.000000e+00 : f32
    %cst_15 = arith.constant 0.000000e+00 : f32
    %28 = vector.broadcast %cst_14 : f32 to vector<96x256xf32>
    %29 = vector.broadcast %cst_15 : f32 to vector<96x256xf32>
    %30 = arith.select %27, %28, %29 : vector<96x256xi1>, vector<96x256xf32>
    %cst_16 = arith.constant dense<0.000000e+00> : vector<32x256xf32>
    %31 = tpu.matmul %24, %30, %cst_16 {dimension_numbers = #tpu.dot_dimension_numbers<[1], [0], [0], [1], [0, 0, 1, 1], [], []>} : vector<32x96xf32>, vector<96x256xf32>, vector<32x256xf32> -> vector<32x256xf32>
    %32 = arith.mulf %31, %31 : vector<32x256xf32>
    %cst_17 = arith.constant dense<0.000000e+00> : vector<256xf32>
    %33 = vector.multi_reduction <add>, %32, %cst_17 [0] : vector<32x256xf32> to vector<256xf32>
    %34 = vector.shape_cast %33 : vector<256xf32> to vector<1x256xf32>
    %35 = math.sqrt %34 : vector<1x256xf32>
    %cst_18 = arith.constant 1.000000e+00 : f32
    %36 = vector.broadcast %cst_18 : f32 to vector<1x256xf32>
    %37 = arith.cmpf ogt, %35, %36 : vector<1x256xf32>
    %cst_19 = arith.constant 1.000000e-07 : f32
    %38 = vector.broadcast %cst_19 : f32 to vector<1x256xf32>
    %39 = arith.addf %35, %38 : vector<1x256xf32>
    %cst_20 = arith.constant 1.000000e+00 : f32
    %40 = vector.broadcast %cst_20 : f32 to vector<1x256xf32>
    %41 = arith.divf %40, %39 : vector<1x256xf32>
    %cst_21 = arith.constant 1.000000e+00 : f32
    %42 = vector.broadcast %cst_21 : f32 to vector<1x256xf32>
    %43 = arith.select %37, %41, %42 : vector<1x256xi1>, vector<1x256xf32>
    %44 = vector.broadcast %43 : vector<1x256xf32> to vector<32x256xf32>
    %45 = arith.mulf %31, %44 : vector<32x256xf32>
    %46 = tpu.concatenate %22, %45 in 0 : vector<32x256xf32>, vector<32x256xf32> -> vector<64x256xf32>
    %c0_22 = arith.constant 0 : index
    %c0_23 = arith.constant 0 : index
    %47 = vector.load %arg5[%c0_22, %c0_23] : memref<32x64xf32, #tpu.memory_space<vmem>>, vector<32x64xf32>
    %cst_24 = arith.constant dense<0.000000e+00> : vector<32x256xf32>
    %48 = tpu.matmul %47, %46, %cst_24 {dimension_numbers = #tpu.dot_dimension_numbers<[1], [0], [0], [1], [0, 0, 1, 1], [], []>} : vector<32x64xf32>, vector<64x256xf32>, vector<32x256xf32> -> vector<32x256xf32>
    %c0_25 = arith.constant 0 : index
    %c0_26 = arith.constant 0 : index
    %49 = vector.load %arg6[%c0_25, %c0_26] : memref<32x1xf32, #tpu.memory_space<vmem>>, vector<32x1xf32>
    %50 = vector.broadcast %49 : vector<32x1xf32> to vector<32x256xf32>
    %51 = arith.addf %48, %50 : vector<32x256xf32>
    %52 = math.tanh %51 : vector<32x256xf32>
    %c0_27 = arith.constant 0 : index
    %c0_28 = arith.constant 0 : index
    %53 = vector.load %arg7[%c0_27, %c0_28] : memref<16x32xf32, #tpu.memory_space<vmem>>, vector<16x32xf32>
    %cst_29 = arith.constant dense<0.000000e+00> : vector<16x256xf32>
    %54 = tpu.matmul %53, %52, %cst_29 {dimension_numbers = #tpu.dot_dimension_numbers<[1], [0], [0], [1], [0, 0, 1, 1], [], []>} : vector<16x32xf32>, vector<32x256xf32>, vector<16x256xf32> -> vector<16x256xf32>
    %c0_30 = arith.constant 0 : index
    %c0_31 = arith.constant 0 : index
    %55 = vector.load %arg8[%c0_30, %c0_31] : memref<16x1xf32, #tpu.memory_space<vmem>>, vector<16x1xf32>
    %56 = vector.broadcast %55 : vector<16x1xf32> to vector<16x256xf32>
    %57 = arith.addf %54, %56 : vector<16x256xf32>
    %58 = math.tanh %57 : vector<16x256xf32>
    %c0_32 = arith.constant 0 : index
    %c0_33 = arith.constant 0 : index
    %59 = vector.load %arg9[%c0_32, %c0_33] : memref<16x1xf32, #tpu.memory_space<vmem>>, vector<16x1xf32>
    %60 = vector.broadcast %59 : vector<16x1xf32> to vector<16x256xf32>
    %61 = arith.mulf %58, %60 : vector<16x256xf32>
    %cst_34 = arith.constant dense<0.000000e+00> : vector<256xf32>
    %62 = vector.multi_reduction <add>, %61, %cst_34 [0] : vector<16x256xf32> to vector<256xf32>
    %63 = vector.shape_cast %62 : vector<256xf32> to vector<1x256xf32>
    %c0_35 = arith.constant 0 : index
    %c0_36 = arith.constant 0 : index
    %64 = memref.load %arg10[%c0_35, %c0_36] : memref<1x1xf32, #tpu.memory_space<smem>>
    %65 = vector.broadcast %64 : f32 to vector<1x256xf32>
    %66 = arith.addf %63, %65 : vector<1x256xf32>
    %67 = math.tanh %66 : vector<1x256xf32>
    %68 = arith.negf %67 : vector<1x256xf32>
    %69 = math.exp %68 : vector<1x256xf32>
    %cst_37 = arith.constant 1.000000e+00 : f32
    %70 = vector.broadcast %cst_37 : f32 to vector<1x256xf32>
    %71 = arith.addf %70, %69 : vector<1x256xf32>
    %72 = arith.divf %70, %71 : vector<1x256xf32>
    %c0_38 = arith.constant 0 : index
    %c0_39 = arith.constant 0 : index
    %73 = vector.load %arg11[%c0_38, %c0_39] : memref<1x256xf32, #tpu.memory_space<vmem>>, vector<1x256xf32>
    tpu.vector_store %arg11[%c0_38, %c0_39], %72 {strides = array<i32>} : memref<1x256xf32, #tpu.memory_space<vmem>>, vector<1x256xf32>,
    return
  }
  func.func @transform_0(%arg0: i32) -> (i32, i32) {
    %c0_i32 = arith.constant 0 : i32
    %c0_i32_0 = arith.constant 0 : i32
    return %c0_i32, %arg0 : i32, i32
  }
  func.func @transform_1(%arg0: i32) -> (i32, i32) {
    %c0_i32 = arith.constant 0 : i32
    %c0_i32_0 = arith.constant 0 : i32
    return %c0_i32, %arg0 : i32, i32
  }
  func.func @transform_2(%arg0: i32) -> (i32, i32) {
    %c0_i32 = arith.constant 0 : i32
    %c0_i32_0 = arith.constant 0 : i32
    %c0_i32_1 = arith.constant 0 : i32
    return %c0_i32, %c0_i32_0 : i32, i32
  }
  func.func @transform_3(%arg0: i32) -> (i32, i32) {
    %c0_i32 = arith.constant 0 : i32
    %c0_i32_0 = arith.constant 0 : i32
    %c0_i32_1 = arith.constant 0 : i32
    return %c0_i32, %c0_i32_0 : i32, i32
  }
  func.func @transform_4(%arg0: i32) -> (i32, i32) {
    %c0_i32 = arith.constant 0 : i32
    %c0_i32_0 = arith.constant 0 : i32
    %c0_i32_1 = arith.constant 0 : i32
    return %c0_i32, %c0_i32_0 : i32, i32
  }
  func.func @transform_5(%arg0: i32) -> (i32, i32) {
    %c0_i32 = arith.constant 0 : i32
    %c0_i32_0 = arith.constant 0 : i32
    %c0_i32_1 = arith.constant 0 : i32
    return %c0_i32, %c0_i32_0 : i32, i32
  }
  func.func @transform_6(%arg0: i32) -> (i32, i32) {
    %c0_i32 = arith.constant 0 : i32
    %c0_i32_0 = arith.constant 0 : i32
    %c0_i32_1 = arith.constant 0 : i32
    return %c0_i32, %c0_i32_0 : i32, i32
  }
  func.func @transform_7(%arg0: i32) -> (i32, i32) {
    %c0_i32 = arith.constant 0 : i32
    %c0_i32_0 = arith.constant 0 : i32
    %c0_i32_1 = arith.constant 0 : i32
    return %c0_i32, %c0_i32_0 : i32, i32
  }
  func.func @transform_8(%arg0: i32) -> (i32, i32) {
    %c0_i32 = arith.constant 0 : i32
    %c0_i32_0 = arith.constant 0 : i32
    %c0_i32_1 = arith.constant 0 : i32
    return %c0_i32, %c0_i32_0 : i32, i32
  }
  func.func @transform_9(%arg0: i32) -> (i32, i32) {
    %c0_i32 = arith.constant 0 : i32
    %c0_i32_0 = arith.constant 0 : i32
    %c0_i32_1 = arith.constant 0 : i32
    return %c0_i32, %c0_i32_0 : i32, i32
  }
  func.func @transform_10(%arg0: i32) -> (i32, i32) {
    %c0_i32 = arith.constant 0 : i32
    %c0_i32_0 = arith.constant 0 : i32
    return %c0_i32, %arg0 : i32, i32
  }
}

module attributes {stable_mosaic.version = 11 : i64} {
  func.func @als_mlp_kernel(%arg0: i32, %arg1: memref<1x256xi32, #tpu.memory_space<vmem>>, %arg2: memref<1x256xi32, #tpu.memory_space<vmem>>, %arg3: memref<32x64xf32, #tpu.memory_space<vmem>>, %arg4: memref<32x96xf32, #tpu.memory_space<vmem>>, %arg5: memref<32x64xf32, #tpu.memory_space<vmem>>, %arg6: memref<32x1xf32, #tpu.memory_space<vmem>>, %arg7: memref<16x32xf32, #tpu.memory_space<vmem>>, %arg8: memref<16x1xf32, #tpu.memory_space<vmem>>, %arg9: memref<16x1xf32, #tpu.memory_space<vmem>>, %arg10: memref<1x1xf32, #tpu.memory_space<smem>>, %arg11: memref<1x256xf32, #tpu.memory_space<vmem>>) attributes {dimension_semantics = [#tpu.dimension_semantics<parallel>], iteration_bounds = array<i64: 2>, scalar_prefetch = 0 : i64, scratch_operands = 0 : i64, tpu.core_type = #tpu.core_type<tc>, window_params = [{transform_indices = @transform_0, window_bounds = array<i64: 1, 256>}, {transform_indices = @transform_1, window_bounds = array<i64: 1, 256>}, {pipeline_mode = #tpu.pipeline_mode<synchronous>, transform_indices = @transform_2, window_bounds = array<i64: 32, 64>}, {pipeline_mode = #tpu.pipeline_mode<synchronous>, transform_indices = @transform_3, window_bounds = array<i64: 32, 96>}, {pipeline_mode = #tpu.pipeline_mode<synchronous>, transform_indices = @transform_4, window_bounds = array<i64: 32, 64>}, {pipeline_mode = #tpu.pipeline_mode<synchronous>, transform_indices = @transform_5, window_bounds = array<i64: 32, 1>}, {pipeline_mode = #tpu.pipeline_mode<synchronous>, transform_indices = @transform_6, window_bounds = array<i64: 16, 32>}, {pipeline_mode = #tpu.pipeline_mode<synchronous>, transform_indices = @transform_7, window_bounds = array<i64: 16, 1>}, {pipeline_mode = #tpu.pipeline_mode<synchronous>, transform_indices = @transform_8, window_bounds = array<i64: 16, 1>}, {transform_indices = @transform_9, window_bounds = array<i64: 1, 1>}, {transform_indices = @transform_10, window_bounds = array<i64: 1, 256>}]} {
    %c0 = arith.constant 0 : index
    %c0_0 = arith.constant 0 : index
    %0 = vector.load %arg1[%c0, %c0_0] : memref<1x256xi32, #tpu.memory_space<vmem>>, vector<1x256xi32>
    %c0_1 = arith.constant 0 : index
    %c0_2 = arith.constant 0 : index
    %1 = vector.load %arg3[%c0_1, %c0_2] : memref<32x64xf32, #tpu.memory_space<vmem>>, vector<32x64xf32>
    %2 = tpu.iota {dimensions = array<i32: 0>} : vector<64x256xi32>
    %3 = vector.broadcast %0 : vector<1x256xi32> to vector<64x256xi32>
    %4 = arith.cmpi eq, %2, %3 : vector<64x256xi32>
    %cst = arith.constant 1.000000e+00 : f32
    %cst_3 = arith.constant 0.000000e+00 : f32
    %5 = vector.broadcast %cst : f32 to vector<64x256xf32>
    %6 = vector.broadcast %cst_3 : f32 to vector<64x256xf32>
    %7 = arith.select %4, %5, %6 : vector<64x256xi1>, vector<64x256xf32>
    %cst_4 = arith.constant dense<0.000000e+00> : vector<32x256xf32>
    %8 = tpu.matmul %1, %7, %cst_4 {dimension_numbers = #tpu.dot_dimension_numbers<[1], [0], [0], [1], [0, 0, 1, 1], [], []>} : vector<32x64xf32>, vector<64x256xf32>, vector<32x256xf32> -> vector<32x256xf32>
    %9 = arith.mulf %8, %8 : vector<32x256xf32>
    %cst_5 = arith.constant dense<0.000000e+00> : vector<256xf32>
    %10 = vector.multi_reduction <add>, %9, %cst_5 [0] : vector<32x256xf32> to vector<256xf32>
    %11 = vector.shape_cast %10 : vector<256xf32> to vector<1x256xf32>
    %12 = math.sqrt %11 : vector<1x256xf32>
    %cst_6 = arith.constant 1.000000e+00 : f32
    %13 = vector.broadcast %cst_6 : f32 to vector<1x256xf32>
    %14 = arith.cmpf ogt, %12, %13 : vector<1x256xf32>
    %cst_7 = arith.constant 1.000000e-07 : f32
    %15 = vector.broadcast %cst_7 : f32 to vector<1x256xf32>
    %16 = arith.addf %12, %15 : vector<1x256xf32>
    %cst_8 = arith.constant 1.000000e+00 : f32
    %17 = vector.broadcast %cst_8 : f32 to vector<1x256xf32>
    %18 = arith.divf %17, %16 : vector<1x256xf32>
    %cst_9 = arith.constant 1.000000e+00 : f32
    %19 = vector.broadcast %cst_9 : f32 to vector<1x256xf32>
    %20 = arith.select %14, %18, %19 : vector<1x256xi1>, vector<1x256xf32>
    %21 = vector.broadcast %20 : vector<1x256xf32> to vector<32x256xf32>
    %22 = arith.mulf %8, %21 : vector<32x256xf32>
    %c0_10 = arith.constant 0 : index
    %c0_11 = arith.constant 0 : index
    %23 = vector.load %arg2[%c0_10, %c0_11] : memref<1x256xi32, #tpu.memory_space<vmem>>, vector<1x256xi32>
    %c0_12 = arith.constant 0 : index
    %c0_13 = arith.constant 0 : index
    %24 = vector.load %arg4[%c0_12, %c0_13] : memref<32x96xf32, #tpu.memory_space<vmem>>, vector<32x96xf32>
    %25 = tpu.iota {dimensions = array<i32: 0>} : vector<96x256xi32>
    %26 = vector.broadcast %23 : vector<1x256xi32> to vector<96x256xi32>
    %27 = arith.cmpi eq, %25, %26 : vector<96x256xi32>
    %cst_14 = arith.constant 1.000000e+00 : f32
    %cst_15 = arith.constant 0.000000e+00 : f32
    %28 = vector.broadcast %cst_14 : f32 to vector<96x256xf32>
    %29 = vector.broadcast %cst_15 : f32 to vector<96x256xf32>
    %30 = arith.select %27, %28, %29 : vector<96x256xi1>, vector<96x256xf32>
    %cst_16 = arith.constant dense<0.000000e+00> : vector<32x256xf32>
    %31 = tpu.matmul %24, %30, %cst_16 {dimension_numbers = #tpu.dot_dimension_numbers<[1], [0], [0], [1], [0, 0, 1, 1], [], []>} : vector<32x96xf32>, vector<96x256xf32>, vector<32x256xf32> -> vector<32x256xf32>
    %32 = arith.mulf %31, %31 : vector<32x256xf32>
    %cst_17 = arith.constant dense<0.000000e+00> : vector<256xf32>
    %33 = vector.multi_reduction <add>, %32, %cst_17 [0] : vector<32x256xf32> to vector<256xf32>
    %34 = vector.shape_cast %33 : vector<256xf32> to vector<1x256xf32>
    %35 = math.sqrt %34 : vector<1x256xf32>
    %cst_18 = arith.constant 1.000000e+00 : f32
    %36 = vector.broadcast %cst_18 : f32 to vector<1x256xf32>
    %37 = arith.cmpf ogt, %35, %36 : vector<1x256xf32>
    %cst_19 = arith.constant 1.000000e-07 : f32
    %38 = vector.broadcast %cst_19 : f32 to vector<1x256xf32>
    %39 = arith.addf %35, %38 : vector<1x256xf32>
    %cst_20 = arith.constant 1.000000e+00 : f32
    %40 = vector.broadcast %cst_20 : f32 to vector<1x256xf32>
    %41 = arith.divf %40, %39 : vector<1x256xf32>
    %cst_21 = arith.constant 1.000000e+00 : f32
    %42 = vector.broadcast %cst_21 : f32 to vector<1x256xf32>
    %43 = arith.select %37, %41, %42 : vector<1x256xi1>, vector<1x256xf32>
    %44 = vector.broadcast %43 : vector<1x256xf32> to vector<32x256xf32>
    %45 = arith.mulf %31, %44 : vector<32x256xf32>
    %46 = tpu.concatenate %22, %45 in 0 : vector<32x256xf32>, vector<32x256xf32> -> vector<64x256xf32>
    %c0_22 = arith.constant 0 : index
    %c0_23 = arith.constant 0 : index
    %47 = vector.load %arg5[%c0_22, %c0_23] : memref<32x64xf32, #tpu.memory_space<vmem>>, vector<32x64xf32>
    %cst_24 = arith.constant dense<0.000000e+00> : vector<32x256xf32>
    %48 = tpu.matmul %47, %46, %cst_24 {dimension_numbers = #tpu.dot_dimension_numbers<[1], [0], [0], [1], [0, 0, 1, 1], [], []>} : vector<32x64xf32>, vector<64x256xf32>, vector<32x256xf32> -> vector<32x256xf32>
    %c0_25 = arith.constant 0 : index
    %c0_26 = arith.constant 0 : index
    %49 = vector.load %arg6[%c0_25, %c0_26] : memref<32x1xf32, #tpu.memory_space<vmem>>, vector<32x1xf32>
    %50 = vector.broadcast %49 : vector<32x1xf32> to vector<32x256xf32>
    %51 = arith.addf %48, %50 : vector<32x256xf32>
    %52 = math.tanh %51 : vector<32x256xf32>
    %c0_27 = arith.constant 0 : index
    %c0_28 = arith.constant 0 : index
    %53 = vector.load %arg7[%c0_27, %c0_28] : memref<16x32xf32, #tpu.memory_space<vmem>>, vector<16x32xf32>
    %cst_29 = arith.constant dense<0.000000e+00> : vector<16x256xf32>
    %54 = tpu.matmul %53, %52, %cst_29 {dimension_numbers = #tpu.dot_dimension_numbers<[1], [0], [0], [1], [0, 0, 1, 1], [], []>} : vector<16x32xf32>, vector<32x256xf32>, vector<16x256xf32> -> vector<16x256xf32>
    %c0_30 = arith.constant 0 : index
    %c0_31 = arith.constant 0 : index
    %55 = vector.load %arg8[%c0_30, %c0_31] : memref<16x1xf32, #tpu.memory_space<vmem>>, vector<16x1xf32>
    %56 = vector.broadcast %55 : vector<16x1xf32> to vector<16x256xf32>
    %57 = arith.addf %54, %56 : vector<16x256xf32>
    %58 = math.tanh %57 : vector<16x256xf32>
    %c0_32 = arith.constant 0 : index
    %c0_33 = arith.constant 0 : index
    %59 = vector.load %arg9[%c0_32, %c0_33] : memref<16x1xf32, #tpu.memory_space<vmem>>, vector<16x1xf32>
    %60 = vector.broadcast %59 : vector<16x1xf32> to vector<16x256xf32>
    %61 = arith.mulf %58, %60 : vector<16x256xf32>
    %cst_34 = arith.constant dense<0.000000e+00> : vector<256xf32>
    %62 = vector.multi_reduction <add>, %61, %cst_34 [0] : vector<16x256xf32> to vector<256xf32>
    %63 = vector.shape_cast %62 : vector<256xf32> to vector<1x256xf32>
    %c0_35 = arith.constant 0 : index
    %c0_36 = arith.constant 0 : index
    %64 = memref.load %arg10[%c0_35, %c0_36] : memref<1x1xf32, #tpu.memory_space<smem>>
    %65 = vector.broadcast %64 : f32 to vector<1x256xf32>
    %66 = arith.addf %63, %65 : vector<1x256xf32>
    %67 = math.tanh %66 : vector<1x256xf32>
    %68 = arith.negf %67 : vector<1x256xf32>
    %69 = math.exp %68 : vector<1x256xf32>
    %cst_37 = arith.constant 1.000000e+00 : f32
    %70 = vector.broadcast %cst_37 : f32 to vector<1x256xf32>
    %71 = arith.addf %70, %69 : vector<1x256xf32>
    %72 = arith.divf %70, %71 : vector<1x256xf32>
    %c0_38 = arith.constant 0 : index
    %c0_39 = arith.constant 0 : index
    %73 = vector.load %arg11[%c0_38, %c0_39] : memref<1x256xf32, #tpu.memory_space<vmem>>, vector<1x256xf32>
    tpu.vector_store %arg11[%c0_38, %c0_39], %72 {strides = array<i32>} : memref<1x256xf32, #tpu.memory_space<vmem>>, vector<1x256xf32>,
    return
  }
  func.func @transform_0(%arg0: i32) -> (i32, i32) {
    %c0_i32 = arith.constant 0 : i32
    %c0_i32_0 = arith.constant 0 : i32
    return %c0_i32, %arg0 : i32, i32
  }
  func.func @transform_1(%arg0: i32) -> (i32, i32) {
    %c0_i32 = arith.constant 0 : i32
    %c0_i32_0 = arith.constant 0 : i32
    return %c0_i32, %arg0 : i32, i32
  }
  func.func @transform_2(%arg0: i32) -> (i32, i32) {
    %c0_i32 = arith.constant 0 : i32
    %c0_i32_0 = arith.constant 0 : i32
    %c0_i32_1 = arith.constant 0 : i32
    return %c0_i32, %c0_i32_0 : i32, i32
  }
  func.func @transform_3(%arg0: i32) -> (i32, i32) {
    %c0_i32 = arith.constant 0 : i32
    %c0_i32_0 = arith.constant 0 : i32
    %c0_i32_1 = arith.constant 0 : i32
    return %c0_i32, %c0_i32_0 : i32, i32
  }
  func.func @transform_4(%arg0: i32) -> (i32, i32) {
    %c0_i32 = arith.constant 0 : i32
    %c0_i32_0 = arith.constant 0 : i32
    %c0_i32_1 = arith.constant 0 : i32
    return %c0_i32, %c0_i32_0 : i32, i32
  }
  func.func @transform_5(%arg0: i32) -> (i32, i32) {
    %c0_i32 = arith.constant 0 : i32
    %c0_i32_0 = arith.constant 0 : i32
    %c0_i32_1 = arith.constant 0 : i32
    return %c0_i32, %c0_i32_0 : i32, i32
  }
  func.func @transform_6(%arg0: i32) -> (i32, i32) {
    %c0_i32 = arith.constant 0 : i32
    %c0_i32_0 = arith.constant 0 : i32
    %c0_i32_1 = arith.constant 0 : i32
    return %c0_i32, %c0_i32_0 : i32, i32
  }
  func.func @transform_7(%arg0: i32) -> (i32, i32) {
    %c0_i32 = arith.constant 0 : i32
    %c0_i32_0 = arith.constant 0 : i32
    %c0_i32_1 = arith.constant 0 : i32
    return %c0_i32, %c0_i32_0 : i32, i32
  }
  func.func @transform_8(%arg0: i32) -> (i32, i32) {
    %c0_i32 = arith.constant 0 : i32
    %c0_i32_0 = arith.constant 0 : i32
    %c0_i32_1 = arith.constant 0 : i32
    return %c0_i32, %c0_i32_0 : i32, i32
  }
  func.func @transform_9(%arg0: i32) -> (i32, i32) {
    %c0_i32 = arith.constant 0 : i32
    %c0_i32_0 = arith.constant 0 : i32
    %c0_i32_1 = arith.constant 0 : i32
    return %c0_i32, %c0_i32_0 : i32, i32
  }
  func.func @transform_10(%arg0: i32) -> (i32, i32) {
    %c0_i32 = arith.constant 0 : i32
    %c0_i32_0 = arith.constant 0 : i32
    return %c0_i32, %arg0 : i32, i32
  }
}

</mosaic_0001>

<llo_original>
// kernel: tpu_custom_call.1
$region0: #{tpu_custom_call.1}
  #allocation0 [shape = 'u32[]', space=smem, size = 0x4, offset = 0x4, fixed_abs, tag = 'smem constant byte address 0x4 - core index']
  #allocation1 [shape = 'u32[144,128]{1,0:T(1,128)}', space=vmem, size = 0x12000, scoped, tag = 'internal scratch']
  #allocation2 [shape = 'f32[1,1]{1,0:T(1,128)S(6)}', space=smem, size = 0x200, scoped, tag = 'scoped memory for tpu_custom_call.1']
  %s0 = inlined_call_operand.hbm [shape: s32[1,512], index: 0, kind: input, shape index: {}]
  %s1 = inlined_call_operand.hbm [shape: s32[1,512], index: 1, kind: input, shape index: {}]
  %s2 = inlined_call_operand.vmem [shape: f32[32,64], index: 2, kind: input, shape index: {}]
  %s3 = inlined_call_operand.vmem [shape: f32[32,96], index: 3, kind: input, shape index: {}]
  %s4 = inlined_call_operand.hbm [shape: f32[32,64], index: 4, kind: input, shape index: {}]
  %s5 = inlined_call_operand.vmem [shape: f32[32,1], index: 5, kind: input, shape index: {}]
  %s6 = inlined_call_operand.vmem [shape: f32[16,32], index: 6, kind: input, shape index: {}]
  %s7 = inlined_call_operand.vmem [shape: f32[16,1], index: 7, kind: input, shape index: {}]
  %s8 = inlined_call_operand.vmem [shape: f32[16,1], index: 8, kind: input, shape index: {}]
  %s9 = inlined_call_operand.<no memory space> [shape: f32[1,1], index: 9, kind: input, shape index: {}]
  %s10 = inlined_call_operand.hbm [shape: f32[1,512], index: 10, kind: output, shape index: {}]
  %s11 = sld [smem:[#allocation0]]
  $region85: #{tpu_custom_call.1} parent=0
    _
  %s13 = ssub.s32 1, %s11
  %s14 = scalar_select 0, %s13, %s11
  %15 = sst [smem:[#allocation2]] %s9
  $region1: #{tpu_custom_call.1} parent=0
    #allocation3 [shape = 'u8[2048]{0}', space=vmem, size = 0x800, scoped, tag = 'input window, operand 0']
    #allocation4 [shape = 's32[2]{0}', space=sflag, size = 0x8, scoped, tag = 'scoped memory for tpu_custom_call.1']
    #allocation5 [shape = 's32[2]{0}', space=sflag, size = 0x8, scoped, tag = 'scoped memory for tpu_custom_call.1']
    #allocation6 [shape = 'u8[2048]{0}', space=vmem, size = 0x800, scoped, tag = 'input window, operand 1']
    #allocation7 [shape = 's32[2]{0}', space=sflag, size = 0x8, scoped, tag = 'scoped memory for tpu_custom_call.1']
    #allocation8 [shape = 'u8[16384]{0}', space=vmem, size = 0x4000, scoped, tag = 'input window, operand 4, single buffered']
    #allocation9 [shape = 'u8[2048]{0}', space=vmem, size = 0x800, scoped, tag = 'output window, operand 0']
    %16 = vsyncpa [#allocation4], 0
    %s17 = scalar_lea.sflag [#allocation4], 1
    %18 = vsyncpa %s17, 0
    %19 = vsyncpa [#allocation7], 0
    %s20 = scalar_lea.sflag [#allocation7], 1
    %21 = vsyncpa %s20, 0
    %22 = vsyncpa [#allocation5], 0
    %s23 = scalar_lea.sflag [#allocation5], 1
    %24 = vsyncpa %s23, 0
    loop: start=0, step=1, limit=4
    $region2: #{tpu_custom_call.1} parent=1 // loop_pre_header
      _
    $region3: #{tpu_custom_call.1} parent=1 // loop_header
      %s26 = sphi 0, %s30
      %p27 = scmp.ge.s32.totalorder %s26, 4
      %s36 = sphi 0, %s38
      %s39 = sphi 0, %s36
      %s40 = sphi 0, %s39
      %s56 = sphi 0, %s40
      %s62 = sphi 0, %s64
      %s65 = sphi 0, %s62
      %s66 = sphi 0, %s65
      %s82 = sphi 0, %s66
      %s86 = sphi 0, %s86
      %s88 = sphi 0, %s86
      %s89 = sphi 0, %s88
      %s103 = sphi 0, %s89
      %s107 = sphi 0, %s107
      %s109 = sphi 0, %s107
      %s110 = sphi 0, %s109
      %s124 = sphi 0, %s110
      %s128 = sphi 0, %s128
      %s130 = sphi 0, %s128
      %s131 = sphi 0, %s130
      %s145 = sphi 0, %s131
      %s149 = sphi 0, %s149
      %s151 = sphi 0, %s149
      %s152 = sphi 0, %s151
      %s166 = sphi 0, %s152
      %s170 = sphi 0, %s170
      %s172 = sphi 0, %s170
      %s173 = sphi 0, %s172
      %s187 = sphi 0, %s173
      %s191 = sphi 0, %s191
      %s193 = sphi 0, %s191
      %s194 = sphi 0, %s193
      %s208 = sphi 0, %s194
      %s212 = sphi 0, %s212
      %s214 = sphi 0, %s212
      %s215 = sphi 0, %s214
      %s229 = sphi 0, %s215
      %s233 = sphi 0, %s233
      %s235 = sphi 0, %s233
      %s236 = sphi 0, %s235
      %s250 = sphi 0, %s236
      %s256 = sphi 0, %s258
      %s259 = sphi 0, %s256
      %s260 = sphi 0, %s259
      %s276 = sphi 0, %s260
    $region4: #{tpu_custom_call.1} parent=1 // loop_header_branch
      %29 = sbr.rel (%p27) target = $region8
    $region5: #{tpu_custom_call.1} parent=1 // loop_body
      %s31 = ssub.s32 %s26, 1
      %s32 = ssub.s32 %s26, 2
      %s33 = sadd.s32 %s26, 1
      %s34 = ssub.s32 %s26, %s33
      %p35 = scmp.eq.s32.totalorder %s34, 0
      %s37 = sadd.s32 %s36, 1
      %s38 = scalar_select %p35, %s36, %s37
      %p41 = pneg %p35
      %p42 = scmp.eq.s32.totalorder %s26, 1
      %p43 = por %p41, %p42
      %p44 = scmp.ne.s32.totalorder %s36, %s39
      %p45 = scmp.eq.s32.totalorder %s26, 0
      %p46 = por %p44, %p45
      %p47 = scmp.ne.s32.totalorder %s36, %s39
      %p48 = scmp.eq.s32.totalorder %s31, 1
      %p49 = por %p47, %p48
      %p50 = scmp.ne.s32.totalorder %s39, %s40
      %p51 = scmp.eq.s32.totalorder %s31, 0
      %p52 = por %p50, %p51
      %p53 = scmp.ne.s32.totalorder %s39, %s40
      %p54 = scmp.eq.s32.totalorder %s32, 1
      %p55 = por %p53, %p54
      %p57 = scmp.ne.s32.totalorder %s40, %s56
      %p58 = scmp.eq.s32.totalorder %s32, 0
      %p59 = por %p57, %p58
      %s60 = ssub.s32 %s26, %s33
      %p61 = scmp.eq.s32.totalorder %s60, 0
      %s63 = sadd.s32 %s62, 1
      %s64 = scalar_select %p61, %s62, %s63
      %p67 = pneg %p61
      %p68 = scmp.eq.s32.totalorder %s26, 1
      %p69 = por %p67, %p68
      %p70 = scmp.ne.s32.totalorder %s62, %s65
      %p71 = scmp.eq.s32.totalorder %s26, 0
      %p72 = por %p70, %p71
      %p73 = scmp.ne.s32.totalorder %s62, %s65
      %p74 = scmp.eq.s32.totalorder %s31, 1
      %p75 = por %p73, %p74
      %p76 = scmp.ne.s32.totalorder %s65, %s66
      %p77 = scmp.eq.s32.totalorder %s31, 0
      %p78 = por %p76, %p77
      %p79 = scmp.ne.s32.totalorder %s65, %s66
      %p80 = scmp.eq.s32.totalorder %s32, 1
      %p81 = por %p79, %p80
      %p83 = scmp.ne.s32.totalorder %s66, %s82
      %p84 = scmp.eq.s32.totalorder %s32, 0
      %p85 = por %p83, %p84
      %s87 = sadd.s32 %s86, 1
      %p90 = scmp.eq.s32.totalorder %s26, 1
      %p91 = scmp.ne.s32.totalorder %s86, %s88
      %p92 = scmp.eq.s32.totalorder %s26, 0
      %p93 = por %p91, %p92
      %p94 = scmp.ne.s32.totalorder %s86, %s88
      %p95 = scmp.eq.s32.totalorder %s31, 1
      %p96 = por %p94, %p95
      %p97 = scmp.ne.s32.totalorder %s88, %s89
      %p98 = scmp.eq.s32.totalorder %s31, 0
      %p99 = por %p97, %p98
      %p100 = scmp.ne.s32.totalorder %s88, %s89
      %p101 = scmp.eq.s32.totalorder %s32, 1
      %p102 = por %p100, %p101
      %p104 = scmp.ne.s32.totalorder %s89, %s103
      %p105 = scmp.eq.s32.totalorder %s32, 0
      %p106 = por %p104, %p105
      %s108 = sadd.s32 %s107, 1
      %p111 = scmp.eq.s32.totalorder %s26, 1
      %p112 = scmp.ne.s32.totalorder %s107, %s109
      %p113 = scmp.eq.s32.totalorder %s26, 0
      %p114 = por %p112, %p113
      %p115 = scmp.ne.s32.totalorder %s107, %s109
      %p116 = scmp.eq.s32.totalorder %s31, 1
      %p117 = por %p115, %p116
      %p118 = scmp.ne.s32.totalorder %s109, %s110
      %p119 = scmp.eq.s32.totalorder %s31, 0
      %p120 = por %p118, %p119
      %p121 = scmp.ne.s32.totalorder %s109, %s110
      %p122 = scmp.eq.s32.totalorder %s32, 1
      %p123 = por %p121, %p122
      %p125 = scmp.ne.s32.totalorder %s110, %s124
      %p126 = scmp.eq.s32.totalorder %s32, 0
      %p127 = por %p125, %p126
      %s129 = sadd.s32 %s128, 1
      %p132 = scmp.eq.s32.totalorder %s26, 1
      %p133 = scmp.ne.s32.totalorder %s128, %s130
      %p134 = scmp.eq.s32.totalorder %s26, 0
      %p135 = por %p133, %p134
      %p136 = scmp.ne.s32.totalorder %s128, %s130
      %p137 = scmp.eq.s32.totalorder %s31, 1
      %p138 = por %p136, %p137
      %p139 = scmp.ne.s32.totalorder %s130, %s131
      %p140 = scmp.eq.s32.totalorder %s31, 0
      %p141 = por %p139, %p140
      %p142 = scmp.ne.s32.totalorder %s130, %s131
      %p143 = scmp.eq.s32.totalorder %s32, 1
      %p144 = por %p142, %p143
      %p146 = scmp.ne.s32.totalorder %s131, %s145
      %p147 = scmp.eq.s32.totalorder %s32, 0
      %p148 = por %p146, %p147
      %s150 = sadd.s32 %s149, 1
      %p153 = scmp.eq.s32.totalorder %s26, 1
      %p154 = scmp.ne.s32.totalorder %s149, %s151
      %p155 = scmp.eq.s32.totalorder %s26, 0
      %p156 = por %p154, %p155
      %p157 = scmp.ne.s32.totalorder %s149, %s151
      %p158 = scmp.eq.s32.totalorder %s31, 1
      %p159 = por %p157, %p158
      %p160 = scmp.ne.s32.totalorder %s151, %s152
      %p161 = scmp.eq.s32.totalorder %s31, 0
      %p162 = por %p160, %p161
      %p163 = scmp.ne.s32.totalorder %s151, %s152
      %p164 = scmp.eq.s32.totalorder %s32, 1
      %p165 = por %p163, %p164
      %p167 = scmp.ne.s32.totalorder %s152, %s166
      %p168 = scmp.eq.s32.totalorder %s32, 0
      %p169 = por %p167, %p168
      %s171 = sadd.s32 %s170, 1
      %p174 = scmp.eq.s32.totalorder %s26, 1
      %p175 = scmp.ne.s32.totalorder %s170, %s172
      %p176 = scmp.eq.s32.totalorder %s26, 0
      %p177 = por %p175, %p176
      %p178 = scmp.ne.s32.totalorder %s170, %s172
      %p179 = scmp.eq.s32.totalorder %s31, 1
      %p180 = por %p178, %p179
      %p181 = scmp.ne.s32.totalorder %s172, %s173
      %p182 = scmp.eq.s32.totalorder %s31, 0
      %p183 = por %p181, %p182
      %p184 = scmp.ne.s32.totalorder %s172, %s173
      %p185 = scmp.eq.s32.totalorder %s32, 1
      %p186 = por %p184, %p185
      %p188 = scmp.ne.s32.totalorder %s173, %s187
      %p189 = scmp.eq.s32.totalorder %s32, 0
      %p190 = por %p188, %p189
      %s192 = sadd.s32 %s191, 1
      %p195 = scmp.eq.s32.totalorder %s26, 1
      %p196 = scmp.ne.s32.totalorder %s191, %s193
      %p197 = scmp.eq.s32.totalorder %s26, 0
      %p198 = por %p196, %p197
      %p199 = scmp.ne.s32.totalorder %s191, %s193
      %p200 = scmp.eq.s32.totalorder %s31, 1
      %p201 = por %p199, %p200
      %p202 = scmp.ne.s32.totalorder %s193, %s194
      %p203 = scmp.eq.s32.totalorder %s31, 0
      %p204 = por %p202, %p203
      %p205 = scmp.ne.s32.totalorder %s193, %s194
      %p206 = scmp.eq.s32.totalorder %s32, 1
      %p207 = por %p205, %p206
      %p209 = scmp.ne.s32.totalorder %s194, %s208
      %p210 = scmp.eq.s32.totalorder %s32, 0
      %p211 = por %p209, %p210
      %s213 = sadd.s32 %s212, 1
      %p216 = scmp.eq.s32.totalorder %s26, 1
      %p217 = scmp.ne.s32.totalorder %s212, %s214
      %p218 = scmp.eq.s32.totalorder %s26, 0
      %p219 = por %p217, %p218
      %p220 = scmp.ne.s32.totalorder %s212, %s214
      %p221 = scmp.eq.s32.totalorder %s31, 1
      %p222 = por %p220, %p221
      %p223 = scmp.ne.s32.totalorder %s214, %s215
      %p224 = scmp.eq.s32.totalorder %s31, 0
      %p225 = por %p223, %p224
      %p226 = scmp.ne.s32.totalorder %s214, %s215
      %p227 = scmp.eq.s32.totalorder %s32, 1
      %p228 = por %p226, %p227
      %p230 = scmp.ne.s32.totalorder %s215, %s229
      %p231 = scmp.eq.s32.totalorder %s32, 0
      %p232 = por %p230, %p231
      %s234 = sadd.s32 %s233, 1
      %p237 = scmp.eq.s32.totalorder %s26, 1
      %p238 = scmp.ne.s32.totalorder %s233, %s235
      %p239 = scmp.eq.s32.totalorder %s26, 0
      %p240 = por %p238, %p239
      %p241 = scmp.ne.s32.totalorder %s233, %s235
      %p242 = scmp.eq.s32.totalorder %s31, 1
      %p243 = por %p241, %p242
      %p244 = scmp.ne.s32.totalorder %s235, %s236
      %p245 = scmp.eq.s32.totalorder %s31, 0
      %p246 = por %p244, %p245
      %p247 = scmp.ne.s32.totalorder %s235, %s236
      %p248 = scmp.eq.s32.totalorder %s32, 1
      %p249 = por %p247, %p248
      %p251 = scmp.ne.s32.totalorder %s236, %s250
      %p252 = scmp.eq.s32.totalorder %s32, 0
      %p253 = por %p251, %p252
      %s254 = ssub.s32 %s26, %s33
      %p255 = scmp.eq.s32.totalorder %s254, 0
      %s257 = sadd.s32 %s256, 1
      %s258 = scalar_select %p255, %s256, %s257
      %p261 = pneg %p255
      %p262 = scmp.eq.s32.totalorder %s26, 1
      %p263 = por %p261, %p262
      %p264 = scmp.ne.s32.totalorder %s256, %s259
      %p265 = scmp.eq.s32.totalorder %s26, 0
      %p266 = por %p264, %p265
      %p267 = scmp.ne.s32.totalorder %s256, %s259
      %p268 = scmp.eq.s32.totalorder %s31, 1
      %p269 = por %p267, %p268
      %p270 = scmp.ne.s32.totalorder %s259, %s260
      %p271 = scmp.eq.s32.totalorder %s31, 0
      %p272 = por %p270, %p271
      %p273 = scmp.ne.s32.totalorder %s259, %s260
      %p274 = scmp.eq.s32.totalorder %s32, 1
      %p275 = por %p273, %p274
      %p277 = scmp.ne.s32.totalorder %s260, %s276
      %p278 = scmp.eq.s32.totalorder %s32, 0
      %p279 = por %p277, %p278
      %p280 = scmp.le.s32.totalorder 1, %s26
      %p281 = scmp.lt.s32.totalorder %s26, 3
      %p282 = pnand %p280, %p281
      %p283 = pneg %p282
      // Predicated region
      $region9: #{tpu_custom_call.1} parent=5 // pred_check
        _
      $region10: #{tpu_custom_call.1} parent=5 // pred_check_branch
        %285 = sbr.rel (%p282) target = $region12
      $region11: #{tpu_custom_call.1} parent=5 // pred_region
        %s286 = ssub.s32 %s26, 1
        // Predicated region
        $region13: #{tpu_custom_call.1} parent=11 // pred_check
          %p287 = pneg %p99
        $region14: #{tpu_custom_call.1} parent=11 // pred_check_branch
          %289 = sbr.rel (%p287) target = $region16
        $region15: #{tpu_custom_call.1} parent=11 // pred_region
          _
        $region16: #{tpu_custom_call.1} parent=11 // pred_fallthru
          _
        // Predicated region
        $region17: #{tpu_custom_call.1} parent=11 // pred_check
          %p290 = pneg %p120
        $region18: #{tpu_custom_call.1} parent=11 // pred_check_branch
          %292 = sbr.rel (%p290) target = $region20
        $region19: #{tpu_custom_call.1} parent=11 // pred_region
          _
        $region20: #{tpu_custom_call.1} parent=11 // pred_fallthru
          _
        // Predicated region
        $region21: #{tpu_custom_call.1} parent=11 // pred_check
          %p293 = pneg %p141
        $region22: #{tpu_custom_call.1} parent=11 // pred_check_branch
          %295 = sbr.rel (%p293) target = $region24
        $region23: #{tpu_custom_call.1} parent=11 // pred_region
          %s297 = ssub.s32 512, 512
          %298 = vsyncadd [#allocation7], %s297
          %s299 = sshll.u32 [#allocation8], 4
          %s300 = int_to_ptr.vmem [resolvable:$true] %s299
          %305 = dma.hbm_to_vmem [thread:$0]  %s4, 512, %s300, [#allocation7], 128, 128, 8
        $region24: #{tpu_custom_call.1} parent=11 // pred_fallthru
          _
        // Predicated region
        $region25: #{tpu_custom_call.1} parent=11 // pred_check
          %p306 = pneg %p162
        $region26: #{tpu_custom_call.1} parent=11 // pred_check_branch
          %308 = sbr.rel (%p306) target = $region28
        $region27: #{tpu_custom_call.1} parent=11 // pred_region
          _
        $region28: #{tpu_custom_call.1} parent=11 // pred_fallthru
          _
        // Predicated region
        $region29: #{tpu_custom_call.1} parent=11 // pred_check
          %p309 = pneg %p183
        $region30: #{tpu_custom_call.1} parent=11 // pred_check_branch
          %311 = sbr.rel (%p309) target = $region32
        $region31: #{tpu_custom_call.1} parent=11 // pred_region
          _
        $region32: #{tpu_custom_call.1} parent=11 // pred_fallthru
          _
        // Predicated region
        $region33: #{tpu_custom_call.1} parent=11 // pred_check
          %p312 = pneg %p204
        $region34: #{tpu_custom_call.1} parent=11 // pred_check_branch
          %314 = sbr.rel (%p312) target = $region36
        $region35: #{tpu_custom_call.1} parent=11 // pred_region
          _
        $region36: #{tpu_custom_call.1} parent=11 // pred_fallthru
          _
        // Predicated region
        $region37: #{tpu_custom_call.1} parent=11 // pred_check
          %p315 = pneg %p225
        $region38: #{tpu_custom_call.1} parent=11 // pred_check_branch
          %317 = sbr.rel (%p315) target = $region40
        $region39: #{tpu_custom_call.1} parent=11 // pred_region
          _
        $region40: #{tpu_custom_call.1} parent=11 // pred_fallthru
          _
        // Predicated region
        $region41: #{tpu_custom_call.1} parent=11 // pred_check
          %p318 = pneg %p246
        $region42: #{tpu_custom_call.1} parent=11 // pred_check_branch
          %320 = sbr.rel (%p318) target = $region44
        $region43: #{tpu_custom_call.1} parent=11 // pred_region
          _
        $region44: #{tpu_custom_call.1} parent=11 // pred_fallthru
          _
      $region12: #{tpu_custom_call.1} parent=5 // pred_fallthru
        _
      %p321 = scmp.lt.s32.totalorder %s26, 2
      // Predicated region
      $region45: #{tpu_custom_call.1} parent=5 // pred_check
        %p322 = pneg %p321
      $region46: #{tpu_custom_call.1} parent=5 // pred_check_branch
        %324 = sbr.rel (%p322) target = $region48
      $region47: #{tpu_custom_call.1} parent=5 // pred_region
        // Predicated region
        $region49: #{tpu_custom_call.1} parent=47 // pred_check
          %p325 = pneg %p46
        $region50: #{tpu_custom_call.1} parent=47 // pred_check_branch
          %327 = sbr.rel (%p325) target = $region52
        $region51: #{tpu_custom_call.1} parent=47 // pred_region
          %s328 = sand.u32 %s36, 1
          %s329 = scalar_lea.sflag [#allocation4], %s328
          %s330 = sand.u32 %s36, 1
          %s331 = smul.addr %s330, 2
          %s332 = scalar_lea.vmem [#allocation3], %s331
          %s333 = smul.u32 2, %s26
          %s335 = ssub.s32 32, 32
          %336 = vsyncadd %s329, %s335
          %s337 = smul.addr %s333, 16
          %s338 = scalar_lea.hbm %s0, %s337
          %s340 = sshll.u32 %s332, 4
          %s341 = int_to_ptr.vmem [resolvable:$true] %s340
          %343 = dma.hbm_to_vmem [thread:$0]  %s338, 32, %s341, %s329
        $region52: #{tpu_custom_call.1} parent=47 // pred_fallthru
          _
        // Predicated region
        $region53: #{tpu_custom_call.1} parent=47 // pred_check
          %p344 = pneg %p72
        $region54: #{tpu_custom_call.1} parent=47 // pred_check_branch
          %346 = sbr.rel (%p344) target = $region56
        $region55: #{tpu_custom_call.1} parent=47 // pred_region
          %s347 = sand.u32 %s26, 1
          %s348 = scalar_lea.sflag [#allocation7], %s347
          %s349 = sand.u32 %s62, 1
          %s350 = smul.addr %s349, 2
          %s351 = scalar_lea.vmem [#allocation6], %s350
          %s352 = smul.u32 2, %s26
          %s354 = ssub.s32 32, 32
          %355 = vsyncadd %s348, %s354
          %s356 = smul.addr %s352, 16
          %s357 = scalar_lea.hbm %s1, %s356
          %s359 = sshll.u32 %s351, 4
          %s360 = int_to_ptr.vmem [resolvable:$true] %s359
          %362 = dma.hbm_to_vmem [thread:$0]  %s357, 32, %s360, %s348
        $region56: #{tpu_custom_call.1} parent=47 // pred_fallthru
          _
      $region48: #{tpu_custom_call.1} parent=5 // pred_fallthru
        _
      %p363 = scmp.le.s32.totalorder 1, %s26
      %p364 = scmp.lt.s32.totalorder %s26, 3
      %p365 = pnand %p363, %p364
      %p366 = pneg %p365
      // Predicated region
      $region57: #{tpu_custom_call.1} parent=5 // pred_check
        _
      $region58: #{tpu_custom_call.1} parent=5 // pred_check_branch
        %368 = sbr.rel (%p365) target = $region60
      $region59: #{tpu_custom_call.1} parent=5 // pred_region
        %s369 = ssub.s32 %s26, 1
        %s370 = sand.u32 %s39, 1
        %s371 = scalar_lea.sflag [#allocation4], %s370
        %s372 = sand.u32 %s39, 1
        %s373 = smul.addr %s372, 2
        %s374 = scalar_lea.vmem [#allocation3], %s373
        // Predicated region
        $region61: #{tpu_custom_call.1} parent=59 // pred_check
          %p375 = pneg %p52
        $region62: #{tpu_custom_call.1} parent=59 // pred_check_branch
          %377 = sbr.rel (%p375) target = $region64
        $region63: #{tpu_custom_call.1} parent=59 // pred_region
          %378 = dma.done %s371, 32
        $region64: #{tpu_custom_call.1} parent=59 // pred_fallthru
          _
        %s379 = sand.u32 %s31, 1
        %s380 = scalar_lea.sflag [#allocation7], %s379
        %s381 = sand.u32 %s65, 1
        %s382 = smul.addr %s381, 2
        %s383 = scalar_lea.vmem [#allocation6], %s382
        // Predicated region
        $region65: #{tpu_custom_call.1} parent=59 // pred_check
          %p384 = pneg %p78
        $region66: #{tpu_custom_call.1} parent=59 // pred_check_branch
          %386 = sbr.rel (%p384) target = $region68
        $region67: #{tpu_custom_call.1} parent=59 // pred_region
          %387 = dma.done %s380, 32
        $region68: #{tpu_custom_call.1} parent=59 // pred_fallthru
          _
        // Predicated region
        $region69: #{tpu_custom_call.1} parent=59 // pred_check
          %p388 = pneg %p141
        $region70: #{tpu_custom_call.1} parent=59 // pred_check_branch
          %390 = sbr.rel (%p388) target = $region72
        $region71: #{tpu_custom_call.1} parent=59 // pred_region
          %391 = dma.done [#allocation7], 512
        $region72: #{tpu_custom_call.1} parent=59 // pred_fallthru
          _
        %s392 = sand.u32 %s39, 1
        %s393 = scalar_lea.sflag [#allocation4], %s392
        %s394 = sand.u32 %s39, 1
        %s395 = smul.addr %s394, 2
        %s396 = scalar_lea.vmem [#allocation3], %s395
        %p397 = pneg %p52
        %p398 = pneg %p49
        %s399 = sand.u32 %s31, 1
        %s400 = scalar_lea.sflag [#allocation7], %s399
        %s401 = sand.u32 %s65, 1
        %s402 = smul.addr %s401, 2
        %s403 = scalar_lea.vmem [#allocation6], %s402
        %p404 = pneg %p78
        %p405 = pneg %p75
        %p406 = pneg %p99
        %p407 = pneg %p96
        %p408 = pneg %p120
        %p409 = pneg %p117
        %p410 = pneg %p141
        %p411 = pneg %p138
        %p412 = pneg %p162
        %p413 = pneg %p159
        %p414 = pneg %p183
        %p415 = pneg %p180
        %p416 = pneg %p204
        %p417 = pneg %p201
        %p418 = pneg %p225
        %p419 = pneg %p222
        %p420 = pneg %p246
        %p421 = pneg %p243
        %p422 = pneg %p272
        %p423 = pneg %p269
        %s424 = sand.u32 %s259, 1
        %s425 = scalar_lea.sflag [#allocation5], %s424
        %s426 = sand.u32 %s259, 1
        %s427 = smul.addr %s426, 2
        %s428 = scalar_lea.vmem [#allocation9], %s427
        %s429 = smul.u32 2, %s31
        %s430 = smul.u32 2, %s31
        %s431 = smul.u32 2, %s31
        %v432 = vld [vmem:[%s374] sm:$0x3]
        %v433 = vld [vmem:[%s2] sm:$0xff]
        %v434 = vld [vmem:[%s2 + $0x8] sm:$0xff]
        %v435 = vld [vmem:[%s2 + $0x10] sm:$0xff]
        %v436 = vld [vmem:[%s2 + $0x18] sm:$0xff]
        %v437 = vlaneseq
        %v438 = vshrl.u32 %v437, 7
        %v439 = vadd.s32 %v438, 8
        %v440 = vadd.s32 %v438, 16
        %v441 = vadd.s32 %v438, 24
        %v442 = vadd.s32 %v438, 32
        %v443 = vadd.s32 %v438, 40
        %v444 = vadd.s32 %v438, 48
        %v445 = vadd.s32 %v438, 56
        %v446 = vlaneseq
        %v447 = vshrl.u32 %v446, 7
        %v448 = vsub.s32 0, %v447
        %v449 = vrot.slane %v432, %v448
        %v450 = vlaneseq
        %v451 = vshrl.u32 %v450, 7
        %v452 = vsub.s32 1, %v451
        %v453 = vrot.slane %v432, %v452
        %vm454 = vcmp.eq.s32.totalorder %v438, %v449
        %vm455 = vcmp.eq.s32.totalorder %v438, %v453
        %vm456 = vcmp.eq.s32.totalorder %v439, %v449
        %vm457 = vcmp.eq.s32.totalorder %v439, %v453
        %vm458 = vcmp.eq.s32.totalorder %v440, %v449
        %vm459 = vcmp.eq.s32.totalorder %v440, %v453
        %vm460 = vcmp.eq.s32.totalorder %v441, %v449
        %vm461 = vcmp.eq.s32.totalorder %v441, %v453
        %vm462 = vcmp.eq.s32.totalorder %v442, %v449
        %vm463 = vcmp.eq.s32.totalorder %v442, %v453
        %vm464 = vcmp.eq.s32.totalorder %v443, %v449
        %vm465 = vcmp.eq.s32.totalorder %v443, %v453
        %vm466 = vcmp.eq.s32.totalorder %v444, %v449
        %vm467 = vcmp.eq.s32.totalorder %v444, %v453
        %vm468 = vcmp.eq.s32.totalorder %v445, %v449
        %vm469 = vcmp.eq.s32.totalorder %v445, %v453
        %v470 = vsel %vm454, 1.0, 0.0
        %v471 = vsel %vm455, 1.0, 0.0
        %v472 = vsel %vm456, 1.0, 0.0
        %v473 = vsel %vm457, 1.0, 0.0
        %v474 = vsel %vm458, 1.0, 0.0
        %v475 = vsel %vm459, 1.0, 0.0
        %v476 = vsel %vm460, 1.0, 0.0
        %v477 = vsel %vm461, 1.0, 0.0
        %v478 = vsel %vm462, 1.0, 0.0
        %v479 = vsel %vm463, 1.0, 0.0
        %v480 = vsel %vm464, 1.0, 0.0
        %v481 = vsel %vm465, 1.0, 0.0
        %v482 = vsel %vm466, 1.0, 0.0
        %v483 = vsel %vm467, 1.0, 0.0
        %v484 = vsel %vm468, 1.0, 0.0
        %v485 = vsel %vm469, 1.0, 0.0
        %vm486 = vcmask 523264
        %v488 = vsel %vm486, %v433, 0
        %v491 = vsel %vm486, %v434, 0
        %v494 = vsel %vm486, %v435, 0
        %v497 = vsel %vm486, %v436, 0
        %499 = vmatprep.subr.mxu0 %v471
        %500 = vmatpush1.msra.mxu0 %v470
        %501 = vmatprep.subr.mxu0 %v473
        %502 = vmatpush1.msra.mxu0 %v472
        %503 = vmatprep.subr.mxu0 %v475
        %504 = vmatpush1.msra.mxu0 %v474
        %505 = vmatprep.subr.mxu0 %v477
        %506 = vmatpush1.msra.mxu0 %v476
        %507 = vmatprep.subr.mxu0 %v479
        %508 = vmatpush1.msra.mxu0 %v478
        %509 = vmatprep.subr.mxu0 %v481
        %510 = vmatpush1.msra.mxu0 %v480
        %511 = vmatprep.subr.mxu0 %v483
        %512 = vmatpush1.msra.mxu0 %v482
        %513 = vmatprep.subr.mxu0 %v485
        %514 = vmatpush1.msra.mxu0 %v484
        %515 = vmatprep.subr.mxu0 0.0
        %516 = vmatpush1.msra.mxu0 0.0
        %517 = vmatprep.subr.mxu0 0.0
        %518 = vmatpush1.msra.mxu0 0.0
        %519 = vmatprep.subr.mxu0 0.0
        %520 = vmatpush1.msra.mxu0 0.0
        %521 = vmatprep.subr.mxu0 0.0
        %522 = vmatpush1.msra.mxu0 0.0
        %523 = vmatprep.subr.mxu0 0.0
        %524 = vmatpush1.msra.mxu0 0.0
        %525 = vmatprep.subr.mxu0 0.0
        %526 = vmatpush1.msra.mxu0 0.0
        %527 = vmatprep.subr.mxu0 0.0
        %528 = vmatpush1.msra.mxu0 0.0
        %529 = vmatprep.subr.mxu0 0.0
        %530 = vmatpush1.msra.mxu0 0.0
        %531 = vmatprep.subr.mxu0 0.0
        %532 = vmatpush1.msra.mxu0 0.0
        %533 = vmatprep.subr.mxu0 0.0
        %534 = vmatpush1.msra.mxu0 0.0
        %535 = vmatprep.subr.mxu0 0.0
        %536 = vmatpush1.msra.mxu0 0.0
        %537 = vmatprep.subr.mxu0 0.0
        %538 = vmatpush1.msra.mxu0 0.0
        %539 = vmatprep.subr.mxu0 0.0
        %540 = vmatpush1.msra.mxu0 0.0
        %541 = vmatprep.subr.mxu0 0.0
        %542 = vmatpush1.msra.mxu0 0.0
        %543 = vmatprep.subr.mxu0 0.0
        %544 = vmatpush1.msra.mxu0 0.0
        %545 = vmatprep.subr.mxu0 0.0
        %546 = vmatpush1.msra.mxu0 0.0
        %547 = vmatprep.subr.mxu0 0.0
        %548 = vmatpush1.msra.mxu0 0.0
        %549 = vmatprep.subr.mxu0 0.0
        %550 = vmatpush1.msra.mxu0 0.0
        %551 = vmatprep.subr.mxu0 0.0
        %552 = vmatpush1.msra.mxu0 0.0
        %553 = vmatprep.subr.mxu0 0.0
        %554 = vmatpush1.msra.mxu0 0.0
        %555 = vmatprep.subr.mxu0 0.0
        %556 = vmatpush1.msra.mxu0 0.0
        %557 = vmatprep.subr.mxu0 0.0
        %558 = vmatpush1.msra.mxu0 0.0
        %559 = vmatprep.subr.mxu0 0.0
        %560 = vmatpush1.msra.mxu0 0.0
        %561 = vmatprep.subr.mxu0 0.0
        %562 = vmatpush1.msra.mxu0 0.0
        %563 = vmatprep.mubr.f32.mxu0 0.0
        %564 = vmatmul.mubr.f32.gmra.mrb[0].mxu0 %v488
        %v565 = vpop.f32.mrb[0].mxu0
        %v566 = vadd.f32 0.0, %v565
        %v567 = vpop.f32.mrb[0].mxu0
        %v568 = vadd.f32 0.0, %v567
        %569 = vmatprep.mubr.f32.mxu0 0.0
        %570 = vmatmul.mubr.f32.gmra.mrb[0].mxu0 %v491
        %v571 = vpop.f32.mrb[0].mxu0
        %v572 = vadd.f32 0.0, %v571
        %v573 = vpop.f32.mrb[0].mxu0
        %v574 = vadd.f32 0.0, %v573
        %575 = vmatprep.mubr.f32.mxu0 0.0
        %576 = vmatmul.mubr.f32.gmra.mrb[0].mxu0 %v494
        %v577 = vpop.f32.mrb[0].mxu0
        %v578 = vadd.f32 0.0, %v577
        %v579 = vpop.f32.mrb[0].mxu0
        %v580 = vadd.f32 0.0, %v579
        %581 = vmatprep.mubr.f32.mxu0 0.0
        %582 = vmatmul.mubr.f32.gmra.mrb[0].mxu0 %v497
        %v583 = vpop.f32.mrb[0].mxu0
        %v584 = vadd.f32 0.0, %v583
        %v585 = vpop.f32.mrb[0].mxu0
        %v586 = vadd.f32 0.0, %v585
        %587 = vdwg.mxu0
        %v588 = vmul.f32 %v566, %v566
        %v589 = vmul.f32 %v568, %v568
        %v590 = vmul.f32 %v572, %v572
        %v591 = vmul.f32 %v574, %v574
        %v592 = vmul.f32 %v578, %v578
        %v593 = vmul.f32 %v580, %v580
        %v594 = vmul.f32 %v584, %v584
        %v595 = vmul.f32 %v586, %v586
        %v596 = vadd.f32 %v588, %v590
        %v597 = vadd.f32 %v596, %v592
        %v598 = vadd.f32 %v597, %v594
        %v599 = vrot.slane %v598, 4
        %v600 = vadd.f32 %v598, %v599
        %v601 = vrot.slane %v600, 2
        %v602 = vadd.f32 %v600, %v601
        %v603 = vrot.slane %v602, 1
        %v604 = vadd.f32 %v602, %v603
        %v605 = vadd.f32 %v589, %v591
        %v606 = vadd.f32 %v605, %v593
        %v607 = vadd.f32 %v606, %v595
        %v608 = vrot.slane %v607, 4
        %v609 = vadd.f32 %v607, %v608
        %v610 = vrot.slane %v609, 2
        %v611 = vadd.f32 %v609, %v610
        %v612 = vrot.slane %v611, 1
        %v613 = vadd.f32 %v611, %v612
        %v614 = vrsqrt.pop %v604
        %v615 = vmul.f32 %v604, %v614
        %vm616 = vcmp.eq.f32.partialorder %v604, inf
        %v617 = vsel %vm616, %v604, %v615
        %vm618 = vcmp.eq.f32.partialorder %v604, 0.0
        %v619 = vand.u32 %v604, 2147483648
        %v620 = vsel %vm618, %v619, %v617
        %v621 = vrsqrt.pop %v613
        %v622 = vmul.f32 %v613, %v621
        %vm623 = vcmp.eq.f32.partialorder %v613, inf
        %v624 = vsel %vm623, %v613, %v622
        %vm625 = vcmp.eq.f32.partialorder %v613, 0.0
        %v626 = vand.u32 %v613, 2147483648
        %v627 = vsel %vm625, %v626, %v624
        %vm628 = vcmp.gt.f32.partialorder %v620, 1.0
        %vm629 = vcmp.gt.f32.partialorder %v627, 1.0
        %v630 = vadd.f32 %v620, 1e-07
        %v631 = vadd.f32 %v627, 1e-07
        %v632 = vrcp.pop %v630
        %v633 = vmul.f32 1.0, %v632
        %v634 = vrcp.pop %v631
        %v635 = vmul.f32 1.0, %v634
        %v636 = vsel %vm628, %v633, 1.0
        %v637 = vsel %vm629, %v635, 1.0
        %v638 = vmul.f32 %v566, %v636
        %v639 = vmul.f32 %v568, %v637
        %v640 = vmul.f32 %v572, %v636
        %v641 = vmul.f32 %v574, %v637
        %v642 = vmul.f32 %v578, %v636
        %v643 = vmul.f32 %v580, %v637
        %v644 = vmul.f32 %v584, %v636
        %v645 = vmul.f32 %v586, %v637
        %v646 = vld [vmem:[%s383] sm:$0x3]
        %v647 = vld [vmem:[%s3] sm:$0xff]
        %v648 = vld [vmem:[%s3 + $0x8] sm:$0xff]
        %v649 = vld [vmem:[%s3 + $0x10] sm:$0xff]
        %v650 = vld [vmem:[%s3 + $0x18] sm:$0xff]
        %v651 = vadd.s32 %v438, 64
        %v652 = vadd.s32 %v438, 72
        %v653 = vadd.s32 %v438, 80
        %v654 = vadd.s32 %v438, 88
        %v655 = vlaneseq
        %v656 = vshrl.u32 %v655, 7
        %v657 = vsub.s32 0, %v656
        %v658 = vrot.slane %v646, %v657
        %v659 = vlaneseq
        %v660 = vshrl.u32 %v659, 7
        %v661 = vsub.s32 1, %v660
        %v662 = vrot.slane %v646, %v661
        %vm663 = vcmp.eq.s32.totalorder %v438, %v658
        %vm664 = vcmp.eq.s32.totalorder %v438, %v662
        %vm665 = vcmp.eq.s32.totalorder %v439, %v658
        %vm666 = vcmp.eq.s32.totalorder %v439, %v662
        %vm667 = vcmp.eq.s32.totalorder %v440, %v658
        %vm668 = vcmp.eq.s32.totalorder %v440, %v662
        %vm669 = vcmp.eq.s32.totalorder %v441, %v658
        %vm670 = vcmp.eq.s32.totalorder %v441, %v662
        %vm671 = vcmp.eq.s32.totalorder %v442, %v658
        %vm672 = vcmp.eq.s32.totalorder %v442, %v662
        %vm673 = vcmp.eq.s32.totalorder %v443, %v658
        %vm674 = vcmp.eq.s32.totalorder %v443, %v662
        %vm675 = vcmp.eq.s32.totalorder %v444, %v658
        %vm676 = vcmp.eq.s32.totalorder %v444, %v662
        %vm677 = vcmp.eq.s32.totalorder %v445, %v658
        %vm678 = vcmp.eq.s32.totalorder %v445, %v662
        %vm679 = vcmp.eq.s32.totalorder %v651, %v658
        %vm680 = vcmp.eq.s32.totalorder %v651, %v662
        %vm681 = vcmp.eq.s32.totalorder %v652, %v658
        %vm682 = vcmp.eq.s32.totalorder %v652, %v662
        %vm683 = vcmp.eq.s32.totalorder %v653, %v658
        %vm684 = vcmp.eq.s32.totalorder %v653, %v662
        %vm685 = vcmp.eq.s32.totalorder %v654, %v658
        %vm686 = vcmp.eq.s32.totalorder %v654, %v662
        %v687 = vsel %vm663, 1.0, 0.0
        %v688 = vsel %vm664, 1.0, 0.0
        %v689 = vsel %vm665, 1.0, 0.0
        %v690 = vsel %vm666, 1.0, 0.0
        %v691 = vsel %vm667, 1.0, 0.0
        %v692 = vsel %vm668, 1.0, 0.0
        %v693 = vsel %vm669, 1.0, 0.0
        %v694 = vsel %vm670, 1.0, 0.0
        %v695 = vsel %vm671, 1.0, 0.0
        %v696 = vsel %vm672, 1.0, 0.0
        %v697 = vsel %vm673, 1.0, 0.0
        %v698 = vsel %vm674, 1.0, 0.0
        %v699 = vsel %vm675, 1.0, 0.0
        %v700 = vsel %vm676, 1.0, 0.0
        %v701 = vsel %vm677, 1.0, 0.0
        %v702 = vsel %vm678, 1.0, 0.0
        %v703 = vsel %vm679, 1.0, 0.0
        %v704 = vsel %vm680, 1.0, 0.0
        %v705 = vsel %vm681, 1.0, 0.0
        %v706 = vsel %vm682, 1.0, 0.0
        %v707 = vsel %vm683, 1.0, 0.0
        %v708 = vsel %vm684, 1.0, 0.0
        %v709 = vsel %vm685, 1.0, 0.0
        %v710 = vsel %vm686, 1.0, 0.0
        %vm711 = vcmask 785408
        %v713 = vsel %vm711, %v647, 0
        %v716 = vsel %vm711, %v648, 0
        %v719 = vsel %vm711, %v649, 0
        %v722 = vsel %vm711, %v650, 0
        %724 = vmatprep.subr.mxu0 %v688
        %725 = vmatpush1.msra.mxu0 %v687
        %726 = vmatprep.subr.mxu0 %v690
        %727 = vmatpush1.msra.mxu0 %v689
        %728 = vmatprep.subr.mxu0 %v692
        %729 = vmatpush1.msra.mxu0 %v691
        %730 = vmatprep.subr.mxu0 %v694
        %731 = vmatpush1.msra.mxu0 %v693
        %732 = vmatprep.subr.mxu0 %v696
        %733 = vmatpush1.msra.mxu0 %v695
        %734 = vmatprep.subr.mxu0 %v698
        %735 = vmatpush1.msra.mxu0 %v697
        %736 = vmatprep.subr.mxu0 %v700
        %737 = vmatpush1.msra.mxu0 %v699
        %738 = vmatprep.subr.mxu0 %v702
        %739 = vmatpush1.msra.mxu0 %v701
        %740 = vmatprep.subr.mxu0 %v704
        %741 = vmatpush1.msra.mxu0 %v703
        %742 = vmatprep.subr.mxu0 %v706
        %743 = vmatpush1.msra.mxu0 %v705
        %744 = vmatprep.subr.mxu0 %v708
        %745 = vmatpush1.msra.mxu0 %v707
        %746 = vmatprep.subr.mxu0 %v710
        %747 = vmatpush1.msra.mxu0 %v709
        %748 = vmatprep.subr.mxu0 0.0
        %749 = vmatpush1.msra.mxu0 0.0
        %750 = vmatprep.subr.mxu0 0.0
        %751 = vmatpush1.msra.mxu0 0.0
        %752 = vmatprep.subr.mxu0 0.0
        %753 = vmatpush1.msra.mxu0 0.0
        %754 = vmatprep.subr.mxu0 0.0
        %755 = vmatpush1.msra.mxu0 0.0
        %756 = vmatprep.subr.mxu0 0.0
        %757 = vmatpush1.msra.mxu0 0.0
        %758 = vmatprep.subr.mxu0 0.0
        %759 = vmatpush1.msra.mxu0 0.0
        %760 = vmatprep.subr.mxu0 0.0
        %761 = vmatpush1.msra.mxu0 0.0
        %762 = vmatprep.subr.mxu0 0.0
        %763 = vmatpush1.msra.mxu0 0.0
        %764 = vmatprep.subr.mxu0 0.0
        %765 = vmatpush1.msra.mxu0 0.0
        %766 = vmatprep.subr.mxu0 0.0
        %767 = vmatpush1.msra.mxu0 0.0
        %768 = vmatprep.subr.mxu0 0.0
        %769 = vmatpush1.msra.mxu0 0.0
        %770 = vmatprep.subr.mxu0 0.0
        %771 = vmatpush1.msra.mxu0 0.0
        %772 = vmatprep.subr.mxu0 0.0
        %773 = vmatpush1.msra.mxu0 0.0
        %774 = vmatprep.subr.mxu0 0.0
        %775 = vmatpush1.msra.mxu0 0.0
        %776 = vmatprep.subr.mxu0 0.0
        %777 = vmatpush1.msra.mxu0 0.0
        %778 = vmatprep.subr.mxu0 0.0
        %779 = vmatpush1.msra.mxu0 0.0
        %780 = vmatprep.subr.mxu0 0.0
        %781 = vmatpush1.msra.mxu0 0.0
        %782 = vmatprep.subr.mxu0 0.0
        %783 = vmatpush1.msra.mxu0 0.0
        %784 = vmatprep.subr.mxu0 0.0
        %785 = vmatpush1.msra.mxu0 0.0
        %786 = vmatprep.subr.mxu0 0.0
        %787 = vmatpush1.msra.mxu0 0.0
        %788 = vmatprep.mubr.f32.mxu0 0.0
        %789 = vmatmul.mubr.f32.gmra.mrb[0].mxu0 %v713
        %v790 = vpop.f32.mrb[0].mxu0
        %v791 = vadd.f32 0.0, %v790
        %v792 = vpop.f32.mrb[0].mxu0
        %v793 = vadd.f32 0.0, %v792
        %794 = vmatprep.mubr.f32.mxu0 0.0
        %795 = vmatmul.mubr.f32.gmra.mrb[0].mxu0 %v716
        %v796 = vpop.f32.mrb[0].mxu0
        %v797 = vadd.f32 0.0, %v796
        %v798 = vpop.f32.mrb[0].mxu0
        %v799 = vadd.f32 0.0, %v798
        %800 = vmatprep.mubr.f32.mxu0 0.0
        %801 = vmatmul.mubr.f32.gmra.mrb[0].mxu0 %v719
        %v802 = vpop.f32.mrb[0].mxu0
        %v803 = vadd.f32 0.0, %v802
        %v804 = vpop.f32.mrb[0].mxu0
        %v805 = vadd.f32 0.0, %v804
        %806 = vmatprep.mubr.f32.mxu0 0.0
        %807 = vmatmul.mubr.f32.gmra.mrb[0].mxu0 %v722
        %v808 = vpop.f32.mrb[0].mxu0
        %v809 = vadd.f32 0.0, %v808
        %v810 = vpop.f32.mrb[0].mxu0
        %v811 = vadd.f32 0.0, %v810
        %812 = vdwg.mxu0
        %v813 = vmul.f32 %v791, %v791
        %v814 = vmul.f32 %v793, %v793
        %v815 = vmul.f32 %v797, %v797
        %v816 = vmul.f32 %v799, %v799
        %v817 = vmul.f32 %v803, %v803
        %v818 = vmul.f32 %v805, %v805
        %v819 = vmul.f32 %v809, %v809
        %v820 = vmul.f32 %v811, %v811
        %v821 = vadd.f32 %v813, %v815
        %v822 = vadd.f32 %v821, %v817
        %v823 = vadd.f32 %v822, %v819
        %v824 = vrot.slane %v823, 4
        %v825 = vadd.f32 %v823, %v824
        %v826 = vrot.slane %v825, 2
        %v827 = vadd.f32 %v825, %v826
        %v828 = vrot.slane %v827, 1
        %v829 = vadd.f32 %v827, %v828
        %v830 = vadd.f32 %v814, %v816
        %v831 = vadd.f32 %v830, %v818
        %v832 = vadd.f32 %v831, %v820
        %v833 = vrot.slane %v832, 4
        %v834 = vadd.f32 %v832, %v833
        %v835 = vrot.slane %v834, 2
        %v836 = vadd.f32 %v834, %v835
        %v837 = vrot.slane %v836, 1
        %v838 = vadd.f32 %v836, %v837
        %v839 = vrsqrt.pop %v829
        %v840 = vmul.f32 %v829, %v839
        %vm841 = vcmp.eq.f32.partialorder %v829, inf
        %v842 = vsel %vm841, %v829, %v840
        %vm843 = vcmp.eq.f32.partialorder %v829, 0.0
        %v844 = vand.u32 %v829, 2147483648
        %v845 = vsel %vm843, %v844, %v842
        %v846 = vrsqrt.pop %v838
        %v847 = vmul.f32 %v838, %v846
        %vm848 = vcmp.eq.f32.partialorder %v838, inf
        %v849 = vsel %vm848, %v838, %v847
        %vm850 = vcmp.eq.f32.partialorder %v838, 0.0
        %v851 = vand.u32 %v838, 2147483648
        %v852 = vsel %vm850, %v851, %v849
        %vm853 = vcmp.gt.f32.partialorder %v845, 1.0
        %vm854 = vcmp.gt.f32.partialorder %v852, 1.0
        %v855 = vadd.f32 %v845, 1e-07
        %v856 = vadd.f32 %v852, 1e-07
        %v857 = vrcp.pop %v855
        %v858 = vmul.f32 1.0, %v857
        %v859 = vrcp.pop %v856
        %v860 = vmul.f32 1.0, %v859
        %v861 = vsel %vm853, %v858, 1.0
        %v862 = vsel %vm854, %v860, 1.0
        %v863 = vmul.f32 %v791, %v861
        %v864 = vmul.f32 %v793, %v862
        %v865 = vmul.f32 %v797, %v861
        %v866 = vmul.f32 %v799, %v862
        %v867 = vmul.f32 %v803, %v861
        %v868 = vmul.f32 %v805, %v862
        %v869 = vmul.f32 %v809, %v861
        %v870 = vmul.f32 %v811, %v862
        %v871 = vld [vmem:[#allocation8] sm:$0xff]
        %v872 = vld [vmem:[#allocation8 + $0x8] sm:$0xff]
        %v873 = vld [vmem:[#allocation8 + $0x10] sm:$0xff]
        %v874 = vld [vmem:[#allocation8 + $0x18] sm:$0xff]
        %v875 = vld [vmem:[%s5] sm:$0xff]
        %v876 = vld [vmem:[%s5 + $0x8] sm:$0xff]
        %v877 = vld [vmem:[%s5 + $0x10] sm:$0xff]
        %v878 = vld [vmem:[%s5 + $0x18] sm:$0xff]
        %880 = vset.pattern.permute.xlu0 0
        %881 = vperm.xlu0 %880, %v875
        %v882 = vpop.permute.xlu0 %881
        %885 = vset.pattern.permute.xlu0 0
        %886 = vperm.xlu0 %885, %v876
        %v887 = vpop.permute.xlu0 %886
        %890 = vset.pattern.permute.xlu0 0
        %891 = vperm.xlu0 %890, %v877
        %v892 = vpop.permute.xlu0 %891
        %895 = vset.pattern.permute.xlu0 0
        %896 = vperm.xlu0 %895, %v878
        %v897 = vpop.permute.xlu0 %896
        %v900 = vsel %vm486, %v871, 0
        %v903 = vsel %vm486, %v872, 0
        %v906 = vsel %vm486, %v873, 0
        %v909 = vsel %vm486, %v874, 0
        %911 = vmatprep.subr.mxu0 %v639
        %912 = vmatpush1.msra.mxu0 %v638
        %913 = vmatprep.subr.mxu0 %v641
        %914 = vmatpush1.msra.mxu0 %v640
        %915 = vmatprep.subr.mxu0 %v643
        %916 = vmatpush1.msra.mxu0 %v642
        %917 = vmatprep.subr.mxu0 %v645
        %918 = vmatpush1.msra.mxu0 %v644
        %919 = vmatprep.subr.mxu0 %v864
        %920 = vmatpush1.msra.mxu0 %v863
        %921 = vmatprep.subr.mxu0 %v866
        %922 = vmatpush1.msra.mxu0 %v865
        %923 = vmatprep.subr.mxu0 %v868
        %924 = vmatpush1.msra.mxu0 %v867
        %925 = vmatprep.subr.mxu0 %v870
        %926 = vmatpush1.msra.mxu0 %v869
        %927 = vmatprep.subr.mxu0 0.0
        %928 = vmatpush1.msra.mxu0 0.0
        %929 = vmatprep.subr.mxu0 0.0
        %930 = vmatpush1.msra.mxu0 0.0
        %931 = vmatprep.subr.mxu0 0.0
        %932 = vmatpush1.msra.mxu0 0.0
        %933 = vmatprep.subr.mxu0 0.0
        %934 = vmatpush1.msra.mxu0 0.0
        %935 = vmatprep.subr.mxu0 0.0
        %936 = vmatpush1.msra.mxu0 0.0
        %937 = vmatprep.subr.mxu0 0.0
        %938 = vmatpush1.msra.mxu0 0.0
        %939 = vmatprep.subr.mxu0 0.0
        %940 = vmatpush1.msra.mxu0 0.0
        %941 = vmatprep.subr.mxu0 0.0
        %942 = vmatpush1.msra.mxu0 0.0
        %943 = vmatprep.subr.mxu0 0.0
        %944 = vmatpush1.msra.mxu0 0.0
        %945 = vmatprep.subr.mxu0 0.0
        %946 = vmatpush1.msra.mxu0 0.0
        %947 = vmatprep.subr.mxu0 0.0
        %948 = vmatpush1.msra.mxu0 0.0
        %949 = vmatprep.subr.mxu0 0.0
        %950 = vmatpush1.msra.mxu0 0.0
        %951 = vmatprep.subr.mxu0 0.0
        %952 = vmatpush1.msra.mxu0 0.0
        %953 = vmatprep.subr.mxu0 0.0
        %954 = vmatpush1.msra.mxu0 0.0
        %955 = vmatprep.subr.mxu0 0.0
        %956 = vmatpush1.msra.mxu0 0.0
        %957 = vmatprep.subr.mxu0 0.0
        %958 = vmatpush1.msra.mxu0 0.0
        %959 = vmatprep.subr.mxu0 0.0
        %960 = vmatpush1.msra.mxu0 0.0
        %961 = vmatprep.subr.mxu0 0.0
        %962 = vmatpush1.msra.mxu0 0.0
        %963 = vmatprep.subr.mxu0 0.0
        %964 = vmatpush1.msra.mxu0 0.0
        %965 = vmatprep.subr.mxu0 0.0
        %966 = vmatpush1.msra.mxu0 0.0
        %967 = vmatprep.subr.mxu0 0.0
        %968 = vmatpush1.msra.mxu0 0.0
        %969 = vmatprep.subr.mxu0 0.0
        %970 = vmatpush1.msra.mxu0 0.0
        %971 = vmatprep.subr.mxu0 0.0
        %972 = vmatpush1.msra.mxu0 0.0
        %973 = vmatprep.subr.mxu0 0.0
        %974 = vmatpush1.msra.mxu0 0.0
        %975 = vmatprep.mubr.f32.mxu0 0.0
        %976 = vmatmul.mubr.f32.gmra.mrb[0].mxu0 %v900
        %v977 = vpop.f32.mrb[0].mxu0
        %v978 = vadd.f32 %v882, %v977
        %v979 = vpop.f32.mrb[0].mxu0
        %v980 = vadd.f32 %v882, %v979
        %981 = vmatprep.mubr.f32.mxu0 0.0
        %982 = vmatmul.mubr.f32.gmra.mrb[0].mxu0 %v903
        %v983 = vpop.f32.mrb[0].mxu0
        %v984 = vadd.f32 %v887, %v983
        %v985 = vpop.f32.mrb[0].mxu0
        %v986 = vadd.f32 %v887, %v985
        %987 = vmatprep.mubr.f32.mxu0 0.0
        %988 = vmatmul.mubr.f32.gmra.mrb[0].mxu0 %v906
        %v989 = vpop.f32.mrb[0].mxu0
        %v990 = vadd.f32 %v892, %v989
        %v991 = vpop.f32.mrb[0].mxu0
        %v992 = vadd.f32 %v892, %v991
        %993 = vmatprep.mubr.f32.mxu0 0.0
        %994 = vmatmul.mubr.f32.gmra.mrb[0].mxu0 %v909
        %v995 = vpop.f32.mrb[0].mxu0
        %v996 = vadd.f32 %v897, %v995
        %v997 = vpop.f32.mrb[0].mxu0
        %v998 = vadd.f32 %v897, %v997
        %999 = vdwg.mxu0
        %v1000 = vtanh.pop %v978
        %v1001 = vtanh.pop %v980
        %v1002 = vtanh.pop %v984
        %v1003 = vtanh.pop %v986
        %v1004 = vtanh.pop %v990
        %v1005 = vtanh.pop %v992
        %v1006 = vtanh.pop %v996
        %v1007 = vtanh.pop %v998
        %v1008 = vld [vmem:[%s6] sm:$0xff]
        %v1009 = vld [vmem:[%s6 + $0x8] sm:$0xff]
        %v1010 = vld [vmem:[%s7] sm:$0xff]
        %v1011 = vld [vmem:[%s7 + $0x8] sm:$0xff]
        %1013 = vset.pattern.permute.xlu0 0
        %1014 = vperm.xlu0 %1013, %v1010
        %v1015 = vpop.permute.xlu0 %1014
        %1018 = vset.pattern.permute.xlu0 0
        %1019 = vperm.xlu0 %1018, %v1011
        %v1020 = vpop.permute.xlu0 %1019
        %vm1022 = vcmask 261120
        %v1024 = vsel %vm1022, %v1008, 0
        %v1027 = vsel %vm1022, %v1009, 0
        %1029 = vmatprep.subr.mxu0 %v1001
        %1030 = vmatpush1.msra.mxu0 %v1000
        %1031 = vmatprep.subr.mxu0 %v1003
        %1032 = vmatpush1.msra.mxu0 %v1002
        %1033 = vmatprep.subr.mxu0 %v1005
        %1034 = vmatpush1.msra.mxu0 %v1004
        %1035 = vmatprep.subr.mxu0 %v1007
        %1036 = vmatpush1.msra.mxu0 %v1006
        %1037 = vmatprep.subr.mxu0 0.0
        %1038 = vmatpush1.msra.mxu0 0.0
        %1039 = vmatprep.subr.mxu0 0.0
        %1040 = vmatpush1.msra.mxu0 0.0
        %1041 = vmatprep.subr.mxu0 0.0
        %1042 = vmatpush1.msra.mxu0 0.0
        %1043 = vmatprep.subr.mxu0 0.0
        %1044 = vmatpush1.msra.mxu0 0.0
        %1045 = vmatprep.subr.mxu0 0.0
        %1046 = vmatpush1.msra.mxu0 0.0
        %1047 = vmatprep.subr.mxu0 0.0
        %1048 = vmatpush1.msra.mxu0 0.0
        %1049 = vmatprep.subr.mxu0 0.0
        %1050 = vmatpush1.msra.mxu0 0.0
        %1051 = vmatprep.subr.mxu0 0.0
        %1052 = vmatpush1.msra.mxu0 0.0
        %1053 = vmatprep.subr.mxu0 0.0
        %1054 = vmatpush1.msra.mxu0 0.0
        %1055 = vmatprep.subr.mxu0 0.0
        %1056 = vmatpush1.msra.mxu0 0.0
        %1057 = vmatprep.subr.mxu0 0.0
        %1058 = vmatpush1.msra.mxu0 0.0
        %1059 = vmatprep.subr.mxu0 0.0
        %1060 = vmatpush1.msra.mxu0 0.0
        %1061 = vmatprep.subr.mxu0 0.0
        %1062 = vmatpush1.msra.mxu0 0.0
        %1063 = vmatprep.subr.mxu0 0.0
        %1064 = vmatpush1.msra.mxu0 0.0
        %1065 = vmatprep.subr.mxu0 0.0
        %1066 = vmatpush1.msra.mxu0 0.0
        %1067 = vmatprep.subr.mxu0 0.0
        %1068 = vmatpush1.msra.mxu0 0.0
        %1069 = vmatprep.subr.mxu0 0.0
        %1070 = vmatpush1.msra.mxu0 0.0
        %1071 = vmatprep.subr.mxu0 0.0
        %1072 = vmatpush1.msra.mxu0 0.0
        %1073 = vmatprep.subr.mxu0 0.0
        %1074 = vmatpush1.msra.mxu0 0.0
        %1075 = vmatprep.subr.mxu0 0.0
        %1076 = vmatpush1.msra.mxu0 0.0
        %1077 = vmatprep.subr.mxu0 0.0
        %1078 = vmatpush1.msra.mxu0 0.0
        %1079 = vmatprep.subr.mxu0 0.0
        %1080 = vmatpush1.msra.mxu0 0.0
        %1081 = vmatprep.subr.mxu0 0.0
        %1082 = vmatpush1.msra.mxu0 0.0
        %1083 = vmatprep.subr.mxu0 0.0
        %1084 = vmatpush1.msra.mxu0 0.0
        %1085 = vmatprep.subr.mxu0 0.0
        %1086 = vmatpush1.msra.mxu0 0.0
        %1087 = vmatprep.subr.mxu0 0.0
        %1088 = vmatpush1.msra.mxu0 0.0
        %1089 = vmatprep.subr.mxu0 0.0
        %1090 = vmatpush1.msra.mxu0 0.0
        %1091 = vmatprep.subr.mxu0 0.0
        %1092 = vmatpush1.msra.mxu0 0.0
        %1093 = vmatprep.mubr.f32.mxu0 0.0
        %1094 = vmatmul.mubr.f32.gmra.mrb[0].mxu0 %v1024
        %v1095 = vpop.f32.mrb[0].mxu0
        %v1096 = vadd.f32 %v1015, %v1095
        %v1097 = vpop.f32.mrb[0].mxu0
        %v1098 = vadd.f32 %v1015, %v1097
        %1099 = vmatprep.mubr.f32.mxu0 0.0
        %1100 = vmatmul.mubr.f32.gmra.mrb[0].mxu0 %v1027
        %v1101 = vpop.f32.mrb[0].mxu0
        %v1102 = vadd.f32 %v1020, %v1101
        %v1103 = vpop.f32.mrb[0].mxu0
        %v1104 = vadd.f32 %v1020, %v1103
        %1105 = vdwg.mxu0
        %v1106 = vtanh.pop %v1096
        %v1107 = vtanh.pop %v1098
        %v1108 = vtanh.pop %v1102
        %v1109 = vtanh.pop %v1104
        %v1110 = vld [vmem:[%s8] sm:$0xff]
        %v1111 = vld [vmem:[%s8 + $0x8] sm:$0xff]
        %1113 = vset.pattern.permute.xlu0 0
        %1114 = vperm.xlu0 %1113, %v1110
        %v1115 = vpop.permute.xlu0 %1114
        %1118 = vset.pattern.permute.xlu0 0
        %1119 = vperm.xlu0 %1118, %v1111
        %v1120 = vpop.permute.xlu0 %1119
        %v1122 = vmul.f32 %v1106, %v1115
        %v1123 = vmul.f32 %v1107, %v1115
        %v1124 = vmul.f32 %v1108, %v1120
        %v1125 = vmul.f32 %v1109, %v1120
        %v1126 = vadd.f32 %v1122, %v1124
        %v1127 = vrot.slane %v1126, 4
        %v1128 = vadd.f32 %v1126, %v1127
        %v1129 = vrot.slane %v1128, 2
        %v1130 = vadd.f32 %v1128, %v1129
        %v1131 = vrot.slane %v1130, 1
        %v1132 = vadd.f32 %v1130, %v1131
        %v1133 = vadd.f32 %v1123, %v1125
        %v1134 = vrot.slane %v1133, 4
        %v1135 = vadd.f32 %v1133, %v1134
        %v1136 = vrot.slane %v1135, 2
        %v1137 = vadd.f32 %v1135, %v1136
        %v1138 = vrot.slane %v1137, 1
        %v1139 = vadd.f32 %v1137, %v1138
        %s1140 = sld [smem:[#allocation2]]
        %v1141 = vstv %s1140
        %v1142 = vadd.f32 %v1132, %v1141
        %v1143 = vadd.f32 %v1139, %v1141
        %v1144 = vtanh.pop %v1142
        %v1145 = vtanh.pop %v1143
        %v1146 = vxor.u32 %v1144, 2147483648
        %v1147 = vxor.u32 %v1145, 2147483648
        %v1148 = vmul.f32 %v1146, 1.442695
        %v1149 = vpow.pop %v1148
        %v1150 = vmul.f32 %v1147, 1.442695
        %v1151 = vpow.pop %v1150
        %v1152 = vadd.f32 %v1149, 1.0
        %v1153 = vadd.f32 %v1151, 1.0
        %v1154 = vrcp.pop %v1152
        %v1155 = vmul.f32 1.0, %v1154
        %v1156 = vrcp.pop %v1153
        %v1157 = vmul.f32 1.0, %v1156
        %v1160 = vcombine.low %v1155, %v1157
        %v1162 = vunpack.c.l.s4 1966171168
        %v1163 = vunpack.c.0.s8 %v1162
        %v1164 = vlaneseq
        %v1165 = vshrl.u32 %v1164, 7
        %v1166 = vsub.s32 %v1163, %v1165
        %v1167 = vrot.slane %v1160, %v1166
        %v1169 = vunpack.c.l.s4 1966171168
        %v1170 = vunpack.c.0.s8 %v1169
        %v1171 = vlaneseq
        %v1172 = vshrl.u32 %v1171, 7
        %v1173 = vsub.s32 %v1170, %v1172
        %v1174 = vrot.slane %v1167, %v1173
        %v1176 = vlaneseq
        %vm1177 = vcmp.ge.s32.totalorder %v1176, 0
        %vm1178 = vcmp.lt.s32.totalorder %v1176, 256
        %vm1179 = vmand %vm1177, %vm1178
        %1180 = vst.msk [vmem:[%s428] sm:$0x3] %vm1179, %v1174
        %s1181 = sand.u32 %s259, 1
        %s1182 = scalar_lea.sflag [#allocation5], %s1181
        %s1183 = sand.u32 %s259, 1
        %s1184 = smul.addr %s1183, 2
        %s1185 = scalar_lea.vmem [#allocation9], %s1184
        // Predicated region
        $region73: #{tpu_custom_call.1} parent=59 // pred_check
          %p1186 = pneg %p269
        $region74: #{tpu_custom_call.1} parent=59 // pred_check_branch
          %1188 = sbr.rel (%p1186) target = $region76
        $region75: #{tpu_custom_call.1} parent=59 // pred_region
          %s1189 = smul.u32 2, %s31
          %s1191 = ssub.s32 32, 32
          %1192 = vsyncadd %s1182, %s1191
          %s1193 = smul.addr %s1189, 16
          %s1194 = scalar_lea.hbm %s10, %s1193
          %s1196 = sshll.u32 %s1185, 4
          %s1197 = int_to_ptr.vmem [resolvable:$true] %s1196
          %1199 = dma.vmem_to_hbm [thread:$0]  %s1197, 32, %s1194, %s1182
        $region76: #{tpu_custom_call.1} parent=59 // pred_fallthru
          _
      $region60: #{tpu_custom_call.1} parent=5 // pred_fallthru
        _
      %p1200 = scmp.le.s32.totalorder 2, %s26
      // Predicated region
      $region77: #{tpu_custom_call.1} parent=5 // pred_check
        %p1201 = pneg %p1200
      $region78: #{tpu_custom_call.1} parent=5 // pred_check_branch
        %1203 = sbr.rel (%p1201) target = $region80
      $region79: #{tpu_custom_call.1} parent=5 // pred_region
        %s1204 = ssub.s32 %s26, 2
        // Predicated region
        $region81: #{tpu_custom_call.1} parent=79 // pred_check
          %p1205 = pneg %p275
        $region82: #{tpu_custom_call.1} parent=79 // pred_check_branch
          %1207 = sbr.rel (%p1205) target = $region84
        $region83: #{tpu_custom_call.1} parent=79 // pred_region
          %s1208 = sand.u32 %s260, 1
          %s1209 = scalar_lea.sflag [#allocation5], %s1208
          %s1210 = sand.u32 %s260, 1
          %s1211 = smul.addr %s1210, 2
          %s1212 = scalar_lea.vmem [#allocation9], %s1211
          %1213 = dma.done %s1209, 32
        $region84: #{tpu_custom_call.1} parent=79 // pred_fallthru
          _
      $region80: #{tpu_custom_call.1} parent=5 // pred_fallthru
        _
    $region6: #{tpu_custom_call.1} parent=1 // loop_footer
      %s30 = sadd.s32 1, %s26
    $region7: #{tpu_custom_call.1} parent=1 // loop_footer_branch
      %25 = sbr.rel target = $region3
    $region8: #{tpu_custom_call.1} parent=1 // loop_exit
      _
    %1214 = vsyncpa [#allocation4], 1
    %s1215 = scalar_lea.sflag [#allocation4], 1
    %1216 = vsyncpa %s1215, 1
    %1217 = vsyncpa [#allocation7], 1
    %s1218 = scalar_lea.sflag [#allocation7], 1
    %1219 = vsyncpa %s1218, 1
    %1220 = vsyncpa [#allocation5], 1
    %s1221 = scalar_lea.sflag [#allocation5], 1
    %1222 = vsyncpa %s1221, 1

// kernel: tpu_custom_call.1
$region0: #{tpu_custom_call.1}
  #allocation0 [shape = 'u32[]', space=smem, size = 0x4, offset = 0x4, fixed_abs, tag = 'smem constant byte address 0x4 - core index']
  #allocation1 [shape = 'u32[144,128]{1,0:T(1,128)}', space=vmem, size = 0x12000, scoped, tag = 'internal scratch']
  #allocation2 [shape = 'f32[1,1]{1,0:T(1,128)S(6)}', space=smem, size = 0x200, scoped, tag = 'scoped memory for tpu_custom_call.1']
  %s0 = inlined_call_operand.hbm [shape: s32[1,512], index: 0, kind: input, shape index: {}]
  %s1 = inlined_call_operand.hbm [shape: s32[1,512], index: 1, kind: input, shape index: {}]
  %s2 = inlined_call_operand.vmem [shape: f32[32,64], index: 2, kind: input, shape index: {}]
  %s3 = inlined_call_operand.vmem [shape: f32[32,96], index: 3, kind: input, shape index: {}]
  %s4 = inlined_call_operand.hbm [shape: f32[32,64], index: 4, kind: input, shape index: {}]
  %s5 = inlined_call_operand.vmem [shape: f32[32,1], index: 5, kind: input, shape index: {}]
  %s6 = inlined_call_operand.vmem [shape: f32[16,32], index: 6, kind: input, shape index: {}]
  %s7 = inlined_call_operand.vmem [shape: f32[16,1], index: 7, kind: input, shape index: {}]
  %s8 = inlined_call_operand.vmem [shape: f32[16,1], index: 8, kind: input, shape index: {}]
  %s9 = inlined_call_operand.<no memory space> [shape: f32[1,1], index: 9, kind: input, shape index: {}]
  %s10 = inlined_call_operand.hbm [shape: f32[1,512], index: 10, kind: output, shape index: {}]
  %s11 = sld [smem:[#allocation0]]
  $region85: #{tpu_custom_call.1} parent=0
    _
  %s13 = ssub.s32 1, %s11
  %s14 = scalar_select 0, %s13, %s11
  %15 = sst [smem:[#allocation2]] %s9
  $region1: #{tpu_custom_call.1} parent=0
    #allocation3 [shape = 'u8[2048]{0}', space=vmem, size = 0x800, scoped, tag = 'input window, operand 0']
    #allocation4 [shape = 's32[2]{0}', space=sflag, size = 0x8, scoped, tag = 'scoped memory for tpu_custom_call.1']
    #allocation5 [shape = 's32[2]{0}', space=sflag, size = 0x8, scoped, tag = 'scoped memory for tpu_custom_call.1']
    #allocation6 [shape = 'u8[2048]{0}', space=vmem, size = 0x800, scoped, tag = 'input window, operand 1']
    #allocation7 [shape = 's32[2]{0}', space=sflag, size = 0x8, scoped, tag = 'scoped memory for tpu_custom_call.1']
    #allocation8 [shape = 'u8[16384]{0}', space=vmem, size = 0x4000, scoped, tag = 'input window, operand 4, single buffered']
    #allocation9 [shape = 'u8[2048]{0}', space=vmem, size = 0x800, scoped, tag = 'output window, operand 0']
    %16 = vsyncpa [#allocation4], 0
    %s17 = scalar_lea.sflag [#allocation4], 1
    %18 = vsyncpa %s17, 0
    %19 = vsyncpa [#allocation7], 0
    %s20 = scalar_lea.sflag [#allocation7], 1
    %21 = vsyncpa %s20, 0
    %22 = vsyncpa [#allocation5], 0
    %s23 = scalar_lea.sflag [#allocation5], 1
    %24 = vsyncpa %s23, 0
    loop: start=0, step=1, limit=4
    $region2: #{tpu_custom_call.1} parent=1 // loop_pre_header
      _
    $region3: #{tpu_custom_call.1} parent=1 // loop_header
      %s26 = sphi 0, %s30
      %p27 = scmp.ge.s32.totalorder %s26, 4
      %s36 = sphi 0, %s38
      %s39 = sphi 0, %s36
      %s40 = sphi 0, %s39
      %s56 = sphi 0, %s40
      %s62 = sphi 0, %s64
      %s65 = sphi 0, %s62
      %s66 = sphi 0, %s65
      %s82 = sphi 0, %s66
      %s86 = sphi 0, %s86
      %s88 = sphi 0, %s86
      %s89 = sphi 0, %s88
      %s103 = sphi 0, %s89
      %s107 = sphi 0, %s107
      %s109 = sphi 0, %s107
      %s110 = sphi 0, %s109
      %s124 = sphi 0, %s110
      %s128 = sphi 0, %s128
      %s130 = sphi 0, %s128
      %s131 = sphi 0, %s130
      %s145 = sphi 0, %s131
      %s149 = sphi 0, %s149
      %s151 = sphi 0, %s149
      %s152 = sphi 0, %s151
      %s166 = sphi 0, %s152
      %s170 = sphi 0, %s170
      %s172 = sphi 0, %s170
      %s173 = sphi 0, %s172
      %s187 = sphi 0, %s173
      %s191 = sphi 0, %s191
      %s193 = sphi 0, %s191
      %s194 = sphi 0, %s193
      %s208 = sphi 0, %s194
      %s212 = sphi 0, %s212
      %s214 = sphi 0, %s212
      %s215 = sphi 0, %s214
      %s229 = sphi 0, %s215
      %s233 = sphi 0, %s233
      %s235 = sphi 0, %s233
      %s236 = sphi 0, %s235
      %s250 = sphi 0, %s236
      %s256 = sphi 0, %s258
      %s259 = sphi 0, %s256
      %s260 = sphi 0, %s259
      %s276 = sphi 0, %s260
    $region4: #{tpu_custom_call.1} parent=1 // loop_header_branch
      %29 = sbr.rel (%p27) target = $region8
    $region5: #{tpu_custom_call.1} parent=1 // loop_body
      %s31 = ssub.s32 %s26, 1
      %s32 = ssub.s32 %s26, 2
      %s33 = sadd.s32 %s26, 1
      %s34 = ssub.s32 %s26, %s33
      %p35 = scmp.eq.s32.totalorder %s34, 0
      %s37 = sadd.s32 %s36, 1
      %s38 = scalar_select %p35, %s36, %s37
      %p41 = pneg %p35
      %p42 = scmp.eq.s32.totalorder %s26, 1
      %p43 = por %p41, %p42
      %p44 = scmp.ne.s32.totalorder %s36, %s39
      %p45 = scmp.eq.s32.totalorder %s26, 0
      %p46 = por %p44, %p45
      %p47 = scmp.ne.s32.totalorder %s36, %s39
      %p48 = scmp.eq.s32.totalorder %s31, 1
      %p49 = por %p47, %p48
      %p50 = scmp.ne.s32.totalorder %s39, %s40
      %p51 = scmp.eq.s32.totalorder %s31, 0
      %p52 = por %p50, %p51
      %p53 = scmp.ne.s32.totalorder %s39, %s40
      %p54 = scmp.eq.s32.totalorder %s32, 1
      %p55 = por %p53, %p54
      %p57 = scmp.ne.s32.totalorder %s40, %s56
      %p58 = scmp.eq.s32.totalorder %s32, 0
      %p59 = por %p57, %p58
      %s60 = ssub.s32 %s26, %s33
      %p61 = scmp.eq.s32.totalorder %s60, 0
      %s63 = sadd.s32 %s62, 1
      %s64 = scalar_select %p61, %s62, %s63
      %p67 = pneg %p61
      %p68 = scmp.eq.s32.totalorder %s26, 1
      %p69 = por %p67, %p68
      %p70 = scmp.ne.s32.totalorder %s62, %s65
      %p71 = scmp.eq.s32.totalorder %s26, 0
      %p72 = por %p70, %p71
      %p73 = scmp.ne.s32.totalorder %s62, %s65
      %p74 = scmp.eq.s32.totalorder %s31, 1
      %p75 = por %p73, %p74
      %p76 = scmp.ne.s32.totalorder %s65, %s66
      %p77 = scmp.eq.s32.totalorder %s31, 0
      %p78 = por %p76, %p77
      %p79 = scmp.ne.s32.totalorder %s65, %s66
      %p80 = scmp.eq.s32.totalorder %s32, 1
      %p81 = por %p79, %p80
      %p83 = scmp.ne.s32.totalorder %s66, %s82
      %p84 = scmp.eq.s32.totalorder %s32, 0
      %p85 = por %p83, %p84
      %s87 = sadd.s32 %s86, 1
      %p90 = scmp.eq.s32.totalorder %s26, 1
      %p91 = scmp.ne.s32.totalorder %s86, %s88
      %p92 = scmp.eq.s32.totalorder %s26, 0
      %p93 = por %p91, %p92
      %p94 = scmp.ne.s32.totalorder %s86, %s88
      %p95 = scmp.eq.s32.totalorder %s31, 1
      %p96 = por %p94, %p95
      %p97 = scmp.ne.s32.totalorder %s88, %s89
      %p98 = scmp.eq.s32.totalorder %s31, 0
      %p99 = por %p97, %p98
      %p100 = scmp.ne.s32.totalorder %s88, %s89
      %p101 = scmp.eq.s32.totalorder %s32, 1
      %p102 = por %p100, %p101
      %p104 = scmp.ne.s32.totalorder %s89, %s103
      %p105 = scmp.eq.s32.totalorder %s32, 0
      %p106 = por %p104, %p105
      %s108 = sadd.s32 %s107, 1
      %p111 = scmp.eq.s32.totalorder %s26, 1
      %p112 = scmp.ne.s32.totalorder %s107, %s109
      %p113 = scmp.eq.s32.totalorder %s26, 0
      %p114 = por %p112, %p113
      %p115 = scmp.ne.s32.totalorder %s107, %s109
      %p116 = scmp.eq.s32.totalorder %s31, 1
      %p117 = por %p115, %p116
      %p118 = scmp.ne.s32.totalorder %s109, %s110
      %p119 = scmp.eq.s32.totalorder %s31, 0
      %p120 = por %p118, %p119
      %p121 = scmp.ne.s32.totalorder %s109, %s110
      %p122 = scmp.eq.s32.totalorder %s32, 1
      %p123 = por %p121, %p122
      %p125 = scmp.ne.s32.totalorder %s110, %s124
      %p126 = scmp.eq.s32.totalorder %s32, 0
      %p127 = por %p125, %p126
      %s129 = sadd.s32 %s128, 1
      %p132 = scmp.eq.s32.totalorder %s26, 1
      %p133 = scmp.ne.s32.totalorder %s128, %s130
      %p134 = scmp.eq.s32.totalorder %s26, 0
      %p135 = por %p133, %p134
      %p136 = scmp.ne.s32.totalorder %s128, %s130
      %p137 = scmp.eq.s32.totalorder %s31, 1
      %p138 = por %p136, %p137
      %p139 = scmp.ne.s32.totalorder %s130, %s131
      %p140 = scmp.eq.s32.totalorder %s31, 0
      %p141 = por %p139, %p140
      %p142 = scmp.ne.s32.totalorder %s130, %s131
      %p143 = scmp.eq.s32.totalorder %s32, 1
      %p144 = por %p142, %p143
      %p146 = scmp.ne.s32.totalorder %s131, %s145
      %p147 = scmp.eq.s32.totalorder %s32, 0
      %p148 = por %p146, %p147
      %s150 = sadd.s32 %s149, 1
      %p153 = scmp.eq.s32.totalorder %s26, 1
      %p154 = scmp.ne.s32.totalorder %s149, %s151
      %p155 = scmp.eq.s32.totalorder %s26, 0
      %p156 = por %p154, %p155
      %p157 = scmp.ne.s32.totalorder %s149, %s151
      %p158 = scmp.eq.s32.totalorder %s31, 1
      %p159 = por %p157, %p158
      %p160 = scmp.ne.s32.totalorder %s151, %s152
      %p161 = scmp.eq.s32.totalorder %s31, 0
      %p162 = por %p160, %p161
      %p163 = scmp.ne.s32.totalorder %s151, %s152
      %p164 = scmp.eq.s32.totalorder %s32, 1
      %p165 = por %p163, %p164
      %p167 = scmp.ne.s32.totalorder %s152, %s166
      %p168 = scmp.eq.s32.totalorder %s32, 0
      %p169 = por %p167, %p168
      %s171 = sadd.s32 %s170, 1
      %p174 = scmp.eq.s32.totalorder %s26, 1
      %p175 = scmp.ne.s32.totalorder %s170, %s172
      %p176 = scmp.eq.s32.totalorder %s26, 0
      %p177 = por %p175, %p176
      %p178 = scmp.ne.s32.totalorder %s170, %s172
      %p179 = scmp.eq.s32.totalorder %s31, 1
      %p180 = por %p178, %p179
      %p181 = scmp.ne.s32.totalorder %s172, %s173
      %p182 = scmp.eq.s32.totalorder %s31, 0
      %p183 = por %p181, %p182
      %p184 = scmp.ne.s32.totalorder %s172, %s173
      %p185 = scmp.eq.s32.totalorder %s32, 1
      %p186 = por %p184, %p185
      %p188 = scmp.ne.s32.totalorder %s173, %s187
      %p189 = scmp.eq.s32.totalorder %s32, 0
      %p190 = por %p188, %p189
      %s192 = sadd.s32 %s191, 1
      %p195 = scmp.eq.s32.totalorder %s26, 1
      %p196 = scmp.ne.s32.totalorder %s191, %s193
      %p197 = scmp.eq.s32.totalorder %s26, 0
      %p198 = por %p196, %p197
      %p199 = scmp.ne.s32.totalorder %s191, %s193
      %p200 = scmp.eq.s32.totalorder %s31, 1
      %p201 = por %p199, %p200
      %p202 = scmp.ne.s32.totalorder %s193, %s194
      %p203 = scmp.eq.s32.totalorder %s31, 0
      %p204 = por %p202, %p203
      %p205 = scmp.ne.s32.totalorder %s193, %s194
      %p206 = scmp.eq.s32.totalorder %s32, 1
      %p207 = por %p205, %p206
      %p209 = scmp.ne.s32.totalorder %s194, %s208
      %p210 = scmp.eq.s32.totalorder %s32, 0
      %p211 = por %p209, %p210
      %s213 = sadd.s32 %s212, 1
      %p216 = scmp.eq.s32.totalorder %s26, 1
      %p217 = scmp.ne.s32.totalorder %s212, %s214
      %p218 = scmp.eq.s32.totalorder %s26, 0
      %p219 = por %p217, %p218
      %p220 = scmp.ne.s32.totalorder %s212, %s214
      %p221 = scmp.eq.s32.totalorder %s31, 1
      %p222 = por %p220, %p221
      %p223 = scmp.ne.s32.totalorder %s214, %s215
      %p224 = scmp.eq.s32.totalorder %s31, 0
      %p225 = por %p223, %p224
      %p226 = scmp.ne.s32.totalorder %s214, %s215
      %p227 = scmp.eq.s32.totalorder %s32, 1
      %p228 = por %p226, %p227
      %p230 = scmp.ne.s32.totalorder %s215, %s229
      %p231 = scmp.eq.s32.totalorder %s32, 0
      %p232 = por %p230, %p231
      %s234 = sadd.s32 %s233, 1
      %p237 = scmp.eq.s32.totalorder %s26, 1
      %p238 = scmp.ne.s32.totalorder %s233, %s235
      %p239 = scmp.eq.s32.totalorder %s26, 0
      %p240 = por %p238, %p239
      %p241 = scmp.ne.s32.totalorder %s233, %s235
      %p242 = scmp.eq.s32.totalorder %s31, 1
      %p243 = por %p241, %p242
      %p244 = scmp.ne.s32.totalorder %s235, %s236
      %p245 = scmp.eq.s32.totalorder %s31, 0
      %p246 = por %p244, %p245
      %p247 = scmp.ne.s32.totalorder %s235, %s236
      %p248 = scmp.eq.s32.totalorder %s32, 1
      %p249 = por %p247, %p248
      %p251 = scmp.ne.s32.totalorder %s236, %s250
      %p252 = scmp.eq.s32.totalorder %s32, 0
      %p253 = por %p251, %p252
      %s254 = ssub.s32 %s26, %s33
      %p255 = scmp.eq.s32.totalorder %s254, 0
      %s257 = sadd.s32 %s256, 1
      %s258 = scalar_select %p255, %s256, %s257
      %p261 = pneg %p255
      %p262 = scmp.eq.s32.totalorder %s26, 1
      %p263 = por %p261, %p262
      %p264 = scmp.ne.s32.totalorder %s256, %s259
      %p265 = scmp.eq.s32.totalorder %s26, 0
      %p266 = por %p264, %p265
      %p267 = scmp.ne.s32.totalorder %s256, %s259
      %p268 = scmp.eq.s32.totalorder %s31, 1
      %p269 = por %p267, %p268
      %p270 = scmp.ne.s32.totalorder %s259, %s260
      %p271 = scmp.eq.s32.totalorder %s31, 0
      %p272 = por %p270, %p271
      %p273 = scmp.ne.s32.totalorder %s259, %s260
      %p274 = scmp.eq.s32.totalorder %s32, 1
      %p275 = por %p273, %p274
      %p277 = scmp.ne.s32.totalorder %s260, %s276
      %p278 = scmp.eq.s32.totalorder %s32, 0
      %p279 = por %p277, %p278
      %p280 = scmp.le.s32.totalorder 1, %s26
      %p281 = scmp.lt.s32.totalorder %s26, 3
      %p282 = pnand %p280, %p281
      %p283 = pneg %p282
      // Predicated region
      $region9: #{tpu_custom_call.1} parent=5 // pred_check
        _
      $region10: #{tpu_custom_call.1} parent=5 // pred_check_branch
        %285 = sbr.rel (%p282) target = $region12
      $region11: #{tpu_custom_call.1} parent=5 // pred_region
        %s286 = ssub.s32 %s26, 1
        // Predicated region
        $region13: #{tpu_custom_call.1} parent=11 // pred_check
          %p287 = pneg %p99
        $region14: #{tpu_custom_call.1} parent=11 // pred_check_branch
          %289 = sbr.rel (%p287) target = $region16
        $region15: #{tpu_custom_call.1} parent=11 // pred_region
          _
        $region16: #{tpu_custom_call.1} parent=11 // pred_fallthru
          _
        // Predicated region
        $region17: #{tpu_custom_call.1} parent=11 // pred_check
          %p290 = pneg %p120
        $region18: #{tpu_custom_call.1} parent=11 // pred_check_branch
          %292 = sbr.rel (%p290) target = $region20
        $region19: #{tpu_custom_call.1} parent=11 // pred_region
          _
        $region20: #{tpu_custom_call.1} parent=11 // pred_fallthru
          _
        // Predicated region
        $region21: #{tpu_custom_call.1} parent=11 // pred_check
          %p293 = pneg %p141
        $region22: #{tpu_custom_call.1} parent=11 // pred_check_branch
          %295 = sbr.rel (%p293) target = $region24
        $region23: #{tpu_custom_call.1} parent=11 // pred_region
          %s297 = ssub.s32 512, 512
          %298 = vsyncadd [#allocation7], %s297
          %s299 = sshll.u32 [#allocation8], 4
          %s300 = int_to_ptr.vmem [resolvable:$true] %s299
          %305 = dma.hbm_to_vmem [thread:$0]  %s4, 512, %s300, [#allocation7], 128, 128, 8
        $region24: #{tpu_custom_call.1} parent=11 // pred_fallthru
          _
        // Predicated region
        $region25: #{tpu_custom_call.1} parent=11 // pred_check
          %p306 = pneg %p162
        $region26: #{tpu_custom_call.1} parent=11 // pred_check_branch
          %308 = sbr.rel (%p306) target = $region28
        $region27: #{tpu_custom_call.1} parent=11 // pred_region
          _
        $region28: #{tpu_custom_call.1} parent=11 // pred_fallthru
          _
        // Predicated region
        $region29: #{tpu_custom_call.1} parent=11 // pred_check
          %p309 = pneg %p183
        $region30: #{tpu_custom_call.1} parent=11 // pred_check_branch
          %311 = sbr.rel (%p309) target = $region32
        $region31: #{tpu_custom_call.1} parent=11 // pred_region
          _
        $region32: #{tpu_custom_call.1} parent=11 // pred_fallthru
          _
        // Predicated region
        $region33: #{tpu_custom_call.1} parent=11 // pred_check
          %p312 = pneg %p204
        $region34: #{tpu_custom_call.1} parent=11 // pred_check_branch
          %314 = sbr.rel (%p312) target = $region36
        $region35: #{tpu_custom_call.1} parent=11 // pred_region
          _
        $region36: #{tpu_custom_call.1} parent=11 // pred_fallthru
          _
        // Predicated region
        $region37: #{tpu_custom_call.1} parent=11 // pred_check
          %p315 = pneg %p225
        $region38: #{tpu_custom_call.1} parent=11 // pred_check_branch
          %317 = sbr.rel (%p315) target = $region40
        $region39: #{tpu_custom_call.1} parent=11 // pred_region
          _
        $region40: #{tpu_custom_call.1} parent=11 // pred_fallthru
          _
        // Predicated region
        $region41: #{tpu_custom_call.1} parent=11 // pred_check
          %p318 = pneg %p246
        $region42: #{tpu_custom_call.1} parent=11 // pred_check_branch
          %320 = sbr.rel (%p318) target = $region44
        $region43: #{tpu_custom_call.1} parent=11 // pred_region
          _
        $region44: #{tpu_custom_call.1} parent=11 // pred_fallthru
          _
      $region12: #{tpu_custom_call.1} parent=5 // pred_fallthru
        _
      %p321 = scmp.lt.s32.totalorder %s26, 2
      // Predicated region
      $region45: #{tpu_custom_call.1} parent=5 // pred_check
        %p322 = pneg %p321
      $region46: #{tpu_custom_call.1} parent=5 // pred_check_branch
        %324 = sbr.rel (%p322) target = $region48
      $region47: #{tpu_custom_call.1} parent=5 // pred_region
        // Predicated region
        $region49: #{tpu_custom_call.1} parent=47 // pred_check
          %p325 = pneg %p46
        $region50: #{tpu_custom_call.1} parent=47 // pred_check_branch
          %327 = sbr.rel (%p325) target = $region52
        $region51: #{tpu_custom_call.1} parent=47 // pred_region
          %s328 = sand.u32 %s36, 1
          %s329 = scalar_lea.sflag [#allocation4], %s328
          %s330 = sand.u32 %s36, 1
          %s331 = smul.addr %s330, 2
          %s332 = scalar_lea.vmem [#allocation3], %s331
          %s333 = smul.u32 2, %s26
          %s335 = ssub.s32 32, 32
          %336 = vsyncadd %s329, %s335
          %s337 = smul.addr %s333, 16
          %s338 = scalar_lea.hbm %s0, %s337
          %s340 = sshll.u32 %s332, 4
          %s341 = int_to_ptr.vmem [resolvable:$true] %s340
          %343 = dma.hbm_to_vmem [thread:$0]  %s338, 32, %s341, %s329
        $region52: #{tpu_custom_call.1} parent=47 // pred_fallthru
          _
        // Predicated region
        $region53: #{tpu_custom_call.1} parent=47 // pred_check
          %p344 = pneg %p72
        $region54: #{tpu_custom_call.1} parent=47 // pred_check_branch
          %346 = sbr.rel (%p344) target = $region56
        $region55: #{tpu_custom_call.1} parent=47 // pred_region
          %s347 = sand.u32 %s26, 1
          %s348 = scalar_lea.sflag [#allocation7], %s347
          %s349 = sand.u32 %s62, 1
          %s350 = smul.addr %s349, 2
          %s351 = scalar_lea.vmem [#allocation6], %s350
          %s352 = smul.u32 2, %s26
          %s354 = ssub.s32 32, 32
          %355 = vsyncadd %s348, %s354
          %s356 = smul.addr %s352, 16
          %s357 = scalar_lea.hbm %s1, %s356
          %s359 = sshll.u32 %s351, 4
          %s360 = int_to_ptr.vmem [resolvable:$true] %s359
          %362 = dma.hbm_to_vmem [thread:$0]  %s357, 32, %s360, %s348
        $region56: #{tpu_custom_call.1} parent=47 // pred_fallthru
          _
      $region48: #{tpu_custom_call.1} parent=5 // pred_fallthru
        _
      %p363 = scmp.le.s32.totalorder 1, %s26
      %p364 = scmp.lt.s32.totalorder %s26, 3
      %p365 = pnand %p363, %p364
      %p366 = pneg %p365
      // Predicated region
      $region57: #{tpu_custom_call.1} parent=5 // pred_check
        _
      $region58: #{tpu_custom_call.1} parent=5 // pred_check_branch
        %368 = sbr.rel (%p365) target = $region60
      $region59: #{tpu_custom_call.1} parent=5 // pred_region
        %s369 = ssub.s32 %s26, 1
        %s370 = sand.u32 %s39, 1
        %s371 = scalar_lea.sflag [#allocation4], %s370
        %s372 = sand.u32 %s39, 1
        %s373 = smul.addr %s372, 2
        %s374 = scalar_lea.vmem [#allocation3], %s373
        // Predicated region
        $region61: #{tpu_custom_call.1} parent=59 // pred_check
          %p375 = pneg %p52
        $region62: #{tpu_custom_call.1} parent=59 // pred_check_branch
          %377 = sbr.rel (%p375) target = $region64
        $region63: #{tpu_custom_call.1} parent=59 // pred_region
          %378 = dma.done %s371, 32
        $region64: #{tpu_custom_call.1} parent=59 // pred_fallthru
          _
        %s379 = sand.u32 %s31, 1
        %s380 = scalar_lea.sflag [#allocation7], %s379
        %s381 = sand.u32 %s65, 1
        %s382 = smul.addr %s381, 2
        %s383 = scalar_lea.vmem [#allocation6], %s382
        // Predicated region
        $region65: #{tpu_custom_call.1} parent=59 // pred_check
          %p384 = pneg %p78
        $region66: #{tpu_custom_call.1} parent=59 // pred_check_branch
          %386 = sbr.rel (%p384) target = $region68
        $region67: #{tpu_custom_call.1} parent=59 // pred_region
          %387 = dma.done %s380, 32
        $region68: #{tpu_custom_call.1} parent=59 // pred_fallthru
          _
        // Predicated region
        $region69: #{tpu_custom_call.1} parent=59 // pred_check
          %p388 = pneg %p141
        $region70: #{tpu_custom_call.1} parent=59 // pred_check_branch
          %390 = sbr.rel (%p388) target = $region72
        $region71: #{tpu_custom_call.1} parent=59 // pred_region
          %391 = dma.done [#allocation7], 512
        $region72: #{tpu_custom_call.1} parent=59 // pred_fallthru
          _
        %s392 = sand.u32 %s39, 1
        %s393 = scalar_lea.sflag [#allocation4], %s392
        %s394 = sand.u32 %s39, 1
        %s395 = smul.addr %s394, 2
        %s396 = scalar_lea.vmem [#allocation3], %s395
        %p397 = pneg %p52
        %p398 = pneg %p49
        %s399 = sand.u32 %s31, 1
        %s400 = scalar_lea.sflag [#allocation7], %s399
        %s401 = sand.u32 %s65, 1
        %s402 = smul.addr %s401, 2
        %s403 = scalar_lea.vmem [#allocation6], %s402
        %p404 = pneg %p78
        %p405 = pneg %p75
        %p406 = pneg %p99
        %p407 = pneg %p96
        %p408 = pneg %p120
        %p409 = pneg %p117
        %p410 = pneg %p141
        %p411 = pneg %p138
        %p412 = pneg %p162
        %p413 = pneg %p159
        %p414 = pneg %p183
        %p415 = pneg %p180
        %p416 = pneg %p204
        %p417 = pneg %p201
        %p418 = pneg %p225
        %p419 = pneg %p222
        %p420 = pneg %p246
        %p421 = pneg %p243
        %p422 = pneg %p272
        %p423 = pneg %p269
        %s424 = sand.u32 %s259, 1
        %s425 = scalar_lea.sflag [#allocation5], %s424
        %s426 = sand.u32 %s259, 1
        %s427 = smul.addr %s426, 2
        %s428 = scalar_lea.vmem [#allocation9], %s427
        %s429 = smul.u32 2, %s31
        %s430 = smul.u32 2, %s31
        %s431 = smul.u32 2, %s31
        %v432 = vld [vmem:[%s374] sm:$0x3]
        %v433 = vld [vmem:[%s2] sm:$0xff]
        %v434 = vld [vmem:[%s2 + $0x8] sm:$0xff]
        %v435 = vld [vmem:[%s2 + $0x10] sm:$0xff]
        %v436 = vld [vmem:[%s2 + $0x18] sm:$0xff]
        %v437 = vlaneseq
        %v438 = vshrl.u32 %v437, 7
        %v439 = vadd.s32 %v438, 8
        %v440 = vadd.s32 %v438, 16
        %v441 = vadd.s32 %v438, 24
        %v442 = vadd.s32 %v438, 32
        %v443 = vadd.s32 %v438, 40
        %v444 = vadd.s32 %v438, 48
        %v445 = vadd.s32 %v438, 56
        %v446 = vlaneseq
        %v447 = vshrl.u32 %v446, 7
        %v448 = vsub.s32 0, %v447
        %v449 = vrot.slane %v432, %v448
        %v450 = vlaneseq
        %v451 = vshrl.u32 %v450, 7
        %v452 = vsub.s32 1, %v451
        %v453 = vrot.slane %v432, %v452
        %vm454 = vcmp.eq.s32.totalorder %v438, %v449
        %vm455 = vcmp.eq.s32.totalorder %v438, %v453
        %vm456 = vcmp.eq.s32.totalorder %v439, %v449
        %vm457 = vcmp.eq.s32.totalorder %v439, %v453
        %vm458 = vcmp.eq.s32.totalorder %v440, %v449
        %vm459 = vcmp.eq.s32.totalorder %v440, %v453
        %vm460 = vcmp.eq.s32.totalorder %v441, %v449
        %vm461 = vcmp.eq.s32.totalorder %v441, %v453
        %vm462 = vcmp.eq.s32.totalorder %v442, %v449
        %vm463 = vcmp.eq.s32.totalorder %v442, %v453
        %vm464 = vcmp.eq.s32.totalorder %v443, %v449
        %vm465 = vcmp.eq.s32.totalorder %v443, %v453
        %vm466 = vcmp.eq.s32.totalorder %v444, %v449
        %vm467 = vcmp.eq.s32.totalorder %v444, %v453
        %vm468 = vcmp.eq.s32.totalorder %v445, %v449
        %vm469 = vcmp.eq.s32.totalorder %v445, %v453
        %v470 = vsel %vm454, 1.0, 0.0
        %v471 = vsel %vm455, 1.0, 0.0
        %v472 = vsel %vm456, 1.0, 0.0
        %v473 = vsel %vm457, 1.0, 0.0
        %v474 = vsel %vm458, 1.0, 0.0
        %v475 = vsel %vm459, 1.0, 0.0
        %v476 = vsel %vm460, 1.0, 0.0
        %v477 = vsel %vm461, 1.0, 0.0
        %v478 = vsel %vm462, 1.0, 0.0
        %v479 = vsel %vm463, 1.0, 0.0
        %v480 = vsel %vm464, 1.0, 0.0
        %v481 = vsel %vm465, 1.0, 0.0
        %v482 = vsel %vm466, 1.0, 0.0
        %v483 = vsel %vm467, 1.0, 0.0
        %v484 = vsel %vm468, 1.0, 0.0
        %v485 = vsel %vm469, 1.0, 0.0
        %vm486 = vcmask 523264
        %v488 = vsel %vm486, %v433, 0
        %v491 = vsel %vm486, %v434, 0
        %v494 = vsel %vm486, %v435, 0
        %v497 = vsel %vm486, %v436, 0
        %499 = vmatprep.subr.mxu0 %v471
        %500 = vmatpush1.msra.mxu0 %v470
        %501 = vmatprep.subr.mxu0 %v473
        %502 = vmatpush1.msra.mxu0 %v472
        %503 = vmatprep.subr.mxu0 %v475
        %504 = vmatpush1.msra.mxu0 %v474
        %505 = vmatprep.subr.mxu0 %v477
        %506 = vmatpush1.msra.mxu0 %v476
        %507 = vmatprep.subr.mxu0 %v479
        %508 = vmatpush1.msra.mxu0 %v478
        %509 = vmatprep.subr.mxu0 %v481
        %510 = vmatpush1.msra.mxu0 %v480
        %511 = vmatprep.subr.mxu0 %v483
        %512 = vmatpush1.msra.mxu0 %v482
        %513 = vmatprep.subr.mxu0 %v485
        %514 = vmatpush1.msra.mxu0 %v484
        %515 = vmatprep.subr.mxu0 0.0
        %516 = vmatpush1.msra.mxu0 0.0
        %517 = vmatprep.subr.mxu0 0.0
        %518 = vmatpush1.msra.mxu0 0.0
        %519 = vmatprep.subr.mxu0 0.0
        %520 = vmatpush1.msra.mxu0 0.0
        %521 = vmatprep.subr.mxu0 0.0
        %522 = vmatpush1.msra.mxu0 0.0
        %523 = vmatprep.subr.mxu0 0.0
        %524 = vmatpush1.msra.mxu0 0.0
        %525 = vmatprep.subr.mxu0 0.0
        %526 = vmatpush1.msra.mxu0 0.0
        %527 = vmatprep.subr.mxu0 0.0
        %528 = vmatpush1.msra.mxu0 0.0
        %529 = vmatprep.subr.mxu0 0.0
        %530 = vmatpush1.msra.mxu0 0.0
        %531 = vmatprep.subr.mxu0 0.0
        %532 = vmatpush1.msra.mxu0 0.0
        %533 = vmatprep.subr.mxu0 0.0
        %534 = vmatpush1.msra.mxu0 0.0
        %535 = vmatprep.subr.mxu0 0.0
        %536 = vmatpush1.msra.mxu0 0.0
        %537 = vmatprep.subr.mxu0 0.0
        %538 = vmatpush1.msra.mxu0 0.0
        %539 = vmatprep.subr.mxu0 0.0
        %540 = vmatpush1.msra.mxu0 0.0
        %541 = vmatprep.subr.mxu0 0.0
        %542 = vmatpush1.msra.mxu0 0.0
        %543 = vmatprep.subr.mxu0 0.0
        %544 = vmatpush1.msra.mxu0 0.0
        %545 = vmatprep.subr.mxu0 0.0
        %546 = vmatpush1.msra.mxu0 0.0
        %547 = vmatprep.subr.mxu0 0.0
        %548 = vmatpush1.msra.mxu0 0.0
        %549 = vmatprep.subr.mxu0 0.0
        %550 = vmatpush1.msra.mxu0 0.0
        %551 = vmatprep.subr.mxu0 0.0
        %552 = vmatpush1.msra.mxu0 0.0
        %553 = vmatprep.subr.mxu0 0.0
        %554 = vmatpush1.msra.mxu0 0.0
        %555 = vmatprep.subr.mxu0 0.0
        %556 = vmatpush1.msra.mxu0 0.0
        %557 = vmatprep.subr.mxu0 0.0
        %558 = vmatpush1.msra.mxu0 0.0
        %559 = vmatprep.subr.mxu0 0.0
        %560 = vmatpush1.msra.mxu0 0.0
        %561 = vmatprep.subr.mxu0 0.0
        %562 = vmatpush1.msra.mxu0 0.0
        %563 = vmatprep.mubr.f32.mxu0 0.0
        %564 = vmatmul.mubr.f32.gmra.mrb[0].mxu0 %v488
        %v565 = vpop.f32.mrb[0].mxu0
        %v566 = vadd.f32 0.0, %v565
        %v567 = vpop.f32.mrb[0].mxu0
        %v568 = vadd.f32 0.0, %v567
        %569 = vmatprep.mubr.f32.mxu0 0.0
        %570 = vmatmul.mubr.f32.gmra.mrb[0].mxu0 %v491
        %v571 = vpop.f32.mrb[0].mxu0
        %v572 = vadd.f32 0.0, %v571
        %v573 = vpop.f32.mrb[0].mxu0
        %v574 = vadd.f32 0.0, %v573
        %575 = vmatprep.mubr.f32.mxu0 0.0
        %576 = vmatmul.mubr.f32.gmra.mrb[0].mxu0 %v494
        %v577 = vpop.f32.mrb[0].mxu0
        %v578 = vadd.f32 0.0, %v577
        %v579 = vpop.f32.mrb[0].mxu0
        %v580 = vadd.f32 0.0, %v579
        %581 = vmatprep.mubr.f32.mxu0 0.0
        %582 = vmatmul.mubr.f32.gmra.mrb[0].mxu0 %v497
        %v583 = vpop.f32.mrb[0].mxu0
        %v584 = vadd.f32 0.0, %v583
        %v585 = vpop.f32.mrb[0].mxu0
        %v586 = vadd.f32 0.0, %v585
        %587 = vdwg.mxu0
        %v588 = vmul.f32 %v566, %v566
        %v589 = vmul.f32 %v568, %v568
        %v590 = vmul.f32 %v572, %v572
        %v591 = vmul.f32 %v574, %v574
        %v592 = vmul.f32 %v578, %v578
        %v593 = vmul.f32 %v580, %v580
        %v594 = vmul.f32 %v584, %v584
        %v595 = vmul.f32 %v586, %v586
        %v596 = vadd.f32 %v588, %v590
        %v597 = vadd.f32 %v596, %v592
        %v598 = vadd.f32 %v597, %v594
        %v599 = vrot.slane %v598, 4
        %v600 = vadd.f32 %v598, %v599
        %v601 = vrot.slane %v600, 2
        %v602 = vadd.f32 %v600, %v601
        %v603 = vrot.slane %v602, 1
        %v604 = vadd.f32 %v602, %v603
        %v605 = vadd.f32 %v589, %v591
        %v606 = vadd.f32 %v605, %v593
        %v607 = vadd.f32 %v606, %v595
        %v608 = vrot.slane %v607, 4
        %v609 = vadd.f32 %v607, %v608
        %v610 = vrot.slane %v609, 2
        %v611 = vadd.f32 %v609, %v610
        %v612 = vrot.slane %v611, 1
        %v613 = vadd.f32 %v611, %v612
        %v614 = vrsqrt.pop %v604
        %v615 = vmul.f32 %v604, %v614
        %vm616 = vcmp.eq.f32.partialorder %v604, inf
        %v617 = vsel %vm616, %v604, %v615
        %vm618 = vcmp.eq.f32.partialorder %v604, 0.0
        %v619 = vand.u32 %v604, 2147483648
        %v620 = vsel %vm618, %v619, %v617
        %v621 = vrsqrt.pop %v613
        %v622 = vmul.f32 %v613, %v621
        %vm623 = vcmp.eq.f32.partialorder %v613, inf
        %v624 = vsel %vm623, %v613, %v622
        %vm625 = vcmp.eq.f32.partialorder %v613, 0.0
        %v626 = vand.u32 %v613, 2147483648
        %v627 = vsel %vm625, %v626, %v624
        %vm628 = vcmp.gt.f32.partialorder %v620, 1.0
        %vm629 = vcmp.gt.f32.partialorder %v627, 1.0
        %v630 = vadd.f32 %v620, 1e-07
        %v631 = vadd.f32 %v627, 1e-07
        %v632 = vrcp.pop %v630
        %v633 = vmul.f32 1.0, %v632
        %v634 = vrcp.pop %v631
        %v635 = vmul.f32 1.0, %v634
        %v636 = vsel %vm628, %v633, 1.0
        %v637 = vsel %vm629, %v635, 1.0
        %v638 = vmul.f32 %v566, %v636
        %v639 = vmul.f32 %v568, %v637
        %v640 = vmul.f32 %v572, %v636
        %v641 = vmul.f32 %v574, %v637
        %v642 = vmul.f32 %v578, %v636
        %v643 = vmul.f32 %v580, %v637
        %v644 = vmul.f32 %v584, %v636
        %v645 = vmul.f32 %v586, %v637
        %v646 = vld [vmem:[%s383] sm:$0x3]
        %v647 = vld [vmem:[%s3] sm:$0xff]
        %v648 = vld [vmem:[%s3 + $0x8] sm:$0xff]
        %v649 = vld [vmem:[%s3 + $0x10] sm:$0xff]
        %v650 = vld [vmem:[%s3 + $0x18] sm:$0xff]
        %v651 = vadd.s32 %v438, 64
        %v652 = vadd.s32 %v438, 72
        %v653 = vadd.s32 %v438, 80
        %v654 = vadd.s32 %v438, 88
        %v655 = vlaneseq
        %v656 = vshrl.u32 %v655, 7
        %v657 = vsub.s32 0, %v656
        %v658 = vrot.slane %v646, %v657
        %v659 = vlaneseq
        %v660 = vshrl.u32 %v659, 7
        %v661 = vsub.s32 1, %v660
        %v662 = vrot.slane %v646, %v661
        %vm663 = vcmp.eq.s32.totalorder %v438, %v658
        %vm664 = vcmp.eq.s32.totalorder %v438, %v662
        %vm665 = vcmp.eq.s32.totalorder %v439, %v658
        %vm666 = vcmp.eq.s32.totalorder %v439, %v662
        %vm667 = vcmp.eq.s32.totalorder %v440, %v658
        %vm668 = vcmp.eq.s32.totalorder %v440, %v662
        %vm669 = vcmp.eq.s32.totalorder %v441, %v658
        %vm670 = vcmp.eq.s32.totalorder %v441, %v662
        %vm671 = vcmp.eq.s32.totalorder %v442, %v658
        %vm672 = vcmp.eq.s32.totalorder %v442, %v662
        %vm673 = vcmp.eq.s32.totalorder %v443, %v658
        %vm674 = vcmp.eq.s32.totalorder %v443, %v662
        %vm675 = vcmp.eq.s32.totalorder %v444, %v658
        %vm676 = vcmp.eq.s32.totalorder %v444, %v662
        %vm677 = vcmp.eq.s32.totalorder %v445, %v658
        %vm678 = vcmp.eq.s32.totalorder %v445, %v662
        %vm679 = vcmp.eq.s32.totalorder %v651, %v658
        %vm680 = vcmp.eq.s32.totalorder %v651, %v662
        %vm681 = vcmp.eq.s32.totalorder %v652, %v658
        %vm682 = vcmp.eq.s32.totalorder %v652, %v662
        %vm683 = vcmp.eq.s32.totalorder %v653, %v658
        %vm684 = vcmp.eq.s32.totalorder %v653, %v662
        %vm685 = vcmp.eq.s32.totalorder %v654, %v658
        %vm686 = vcmp.eq.s32.totalorder %v654, %v662
        %v687 = vsel %vm663, 1.0, 0.0
        %v688 = vsel %vm664, 1.0, 0.0
        %v689 = vsel %vm665, 1.0, 0.0
        %v690 = vsel %vm666, 1.0, 0.0
        %v691 = vsel %vm667, 1.0, 0.0
        %v692 = vsel %vm668, 1.0, 0.0
        %v693 = vsel %vm669, 1.0, 0.0
        %v694 = vsel %vm670, 1.0, 0.0
        %v695 = vsel %vm671, 1.0, 0.0
        %v696 = vsel %vm672, 1.0, 0.0
        %v697 = vsel %vm673, 1.0, 0.0
        %v698 = vsel %vm674, 1.0, 0.0
        %v699 = vsel %vm675, 1.0, 0.0
        %v700 = vsel %vm676, 1.0, 0.0
        %v701 = vsel %vm677, 1.0, 0.0
        %v702 = vsel %vm678, 1.0, 0.0
        %v703 = vsel %vm679, 1.0, 0.0
        %v704 = vsel %vm680, 1.0, 0.0
        %v705 = vsel %vm681, 1.0, 0.0
        %v706 = vsel %vm682, 1.0, 0.0
        %v707 = vsel %vm683, 1.0, 0.0
        %v708 = vsel %vm684, 1.0, 0.0
        %v709 = vsel %vm685, 1.0, 0.0
        %v710 = vsel %vm686, 1.0, 0.0
        %vm711 = vcmask 785408
        %v713 = vsel %vm711, %v647, 0
        %v716 = vsel %vm711, %v648, 0
        %v719 = vsel %vm711, %v649, 0
        %v722 = vsel %vm711, %v650, 0
        %724 = vmatprep.subr.mxu0 %v688
        %725 = vmatpush1.msra.mxu0 %v687
        %726 = vmatprep.subr.mxu0 %v690
        %727 = vmatpush1.msra.mxu0 %v689
        %728 = vmatprep.subr.mxu0 %v692
        %729 = vmatpush1.msra.mxu0 %v691
        %730 = vmatprep.subr.mxu0 %v694
        %731 = vmatpush1.msra.mxu0 %v693
        %732 = vmatprep.subr.mxu0 %v696
        %733 = vmatpush1.msra.mxu0 %v695
        %734 = vmatprep.subr.mxu0 %v698
        %735 = vmatpush1.msra.mxu0 %v697
        %736 = vmatprep.subr.mxu0 %v700
        %737 = vmatpush1.msra.mxu0 %v699
        %738 = vmatprep.subr.mxu0 %v702
        %739 = vmatpush1.msra.mxu0 %v701
        %740 = vmatprep.subr.mxu0 %v704
        %741 = vmatpush1.msra.mxu0 %v703
        %742 = vmatprep.subr.mxu0 %v706
        %743 = vmatpush1.msra.mxu0 %v705
        %744 = vmatprep.subr.mxu0 %v708
        %745 = vmatpush1.msra.mxu0 %v707
        %746 = vmatprep.subr.mxu0 %v710
        %747 = vmatpush1.msra.mxu0 %v709
        %748 = vmatprep.subr.mxu0 0.0
        %749 = vmatpush1.msra.mxu0 0.0
        %750 = vmatprep.subr.mxu0 0.0
        %751 = vmatpush1.msra.mxu0 0.0
        %752 = vmatprep.subr.mxu0 0.0
        %753 = vmatpush1.msra.mxu0 0.0
        %754 = vmatprep.subr.mxu0 0.0
        %755 = vmatpush1.msra.mxu0 0.0
        %756 = vmatprep.subr.mxu0 0.0
        %757 = vmatpush1.msra.mxu0 0.0
        %758 = vmatprep.subr.mxu0 0.0
        %759 = vmatpush1.msra.mxu0 0.0
        %760 = vmatprep.subr.mxu0 0.0
        %761 = vmatpush1.msra.mxu0 0.0
        %762 = vmatprep.subr.mxu0 0.0
        %763 = vmatpush1.msra.mxu0 0.0
        %764 = vmatprep.subr.mxu0 0.0
        %765 = vmatpush1.msra.mxu0 0.0
        %766 = vmatprep.subr.mxu0 0.0
        %767 = vmatpush1.msra.mxu0 0.0
        %768 = vmatprep.subr.mxu0 0.0
        %769 = vmatpush1.msra.mxu0 0.0
        %770 = vmatprep.subr.mxu0 0.0
        %771 = vmatpush1.msra.mxu0 0.0
        %772 = vmatprep.subr.mxu0 0.0
        %773 = vmatpush1.msra.mxu0 0.0
        %774 = vmatprep.subr.mxu0 0.0
        %775 = vmatpush1.msra.mxu0 0.0
        %776 = vmatprep.subr.mxu0 0.0
        %777 = vmatpush1.msra.mxu0 0.0
        %778 = vmatprep.subr.mxu0 0.0
        %779 = vmatpush1.msra.mxu0 0.0
        %780 = vmatprep.subr.mxu0 0.0
        %781 = vmatpush1.msra.mxu0 0.0
        %782 = vmatprep.subr.mxu0 0.0
        %783 = vmatpush1.msra.mxu0 0.0
        %784 = vmatprep.subr.mxu0 0.0
        %785 = vmatpush1.msra.mxu0 0.0
        %786 = vmatprep.subr.mxu0 0.0
        %787 = vmatpush1.msra.mxu0 0.0
        %788 = vmatprep.mubr.f32.mxu0 0.0
        %789 = vmatmul.mubr.f32.gmra.mrb[0].mxu0 %v713
        %v790 = vpop.f32.mrb[0].mxu0
        %v791 = vadd.f32 0.0, %v790
        %v792 = vpop.f32.mrb[0].mxu0
        %v793 = vadd.f32 0.0, %v792
        %794 = vmatprep.mubr.f32.mxu0 0.0
        %795 = vmatmul.mubr.f32.gmra.mrb[0].mxu0 %v716
        %v796 = vpop.f32.mrb[0].mxu0
        %v797 = vadd.f32 0.0, %v796
        %v798 = vpop.f32.mrb[0].mxu0
        %v799 = vadd.f32 0.0, %v798
        %800 = vmatprep.mubr.f32.mxu0 0.0
        %801 = vmatmul.mubr.f32.gmra.mrb[0].mxu0 %v719
        %v802 = vpop.f32.mrb[0].mxu0
        %v803 = vadd.f32 0.0, %v802
        %v804 = vpop.f32.mrb[0].mxu0
        %v805 = vadd.f32 0.0, %v804
        %806 = vmatprep.mubr.f32.mxu0 0.0
        %807 = vmatmul.mubr.f32.gmra.mrb[0].mxu0 %v722
        %v808 = vpop.f32.mrb[0].mxu0
        %v809 = vadd.f32 0.0, %v808
        %v810 = vpop.f32.mrb[0].mxu0
        %v811 = vadd.f32 0.0, %v810
        %812 = vdwg.mxu0
        %v813 = vmul.f32 %v791, %v791
        %v814 = vmul.f32 %v793, %v793
        %v815 = vmul.f32 %v797, %v797
        %v816 = vmul.f32 %v799, %v799
        %v817 = vmul.f32 %v803, %v803
        %v818 = vmul.f32 %v805, %v805
        %v819 = vmul.f32 %v809, %v809
        %v820 = vmul.f32 %v811, %v811
        %v821 = vadd.f32 %v813, %v815
        %v822 = vadd.f32 %v821, %v817
        %v823 = vadd.f32 %v822, %v819
        %v824 = vrot.slane %v823, 4
        %v825 = vadd.f32 %v823, %v824
        %v826 = vrot.slane %v825, 2
        %v827 = vadd.f32 %v825, %v826
        %v828 = vrot.slane %v827, 1
        %v829 = vadd.f32 %v827, %v828
        %v830 = vadd.f32 %v814, %v816
        %v831 = vadd.f32 %v830, %v818
        %v832 = vadd.f32 %v831, %v820
        %v833 = vrot.slane %v832, 4
        %v834 = vadd.f32 %v832, %v833
        %v835 = vrot.slane %v834, 2
        %v836 = vadd.f32 %v834, %v835
        %v837 = vrot.slane %v836, 1
        %v838 = vadd.f32 %v836, %v837
        %v839 = vrsqrt.pop %v829
        %v840 = vmul.f32 %v829, %v839
        %vm841 = vcmp.eq.f32.partialorder %v829, inf
        %v842 = vsel %vm841, %v829, %v840
        %vm843 = vcmp.eq.f32.partialorder %v829, 0.0
        %v844 = vand.u32 %v829, 2147483648
        %v845 = vsel %vm843, %v844, %v842
        %v846 = vrsqrt.pop %v838
        %v847 = vmul.f32 %v838, %v846
        %vm848 = vcmp.eq.f32.partialorder %v838, inf
        %v849 = vsel %vm848, %v838, %v847
        %vm850 = vcmp.eq.f32.partialorder %v838, 0.0
        %v851 = vand.u32 %v838, 2147483648
        %v852 = vsel %vm850, %v851, %v849
        %vm853 = vcmp.gt.f32.partialorder %v845, 1.0
        %vm854 = vcmp.gt.f32.partialorder %v852, 1.0
        %v855 = vadd.f32 %v845, 1e-07
        %v856 = vadd.f32 %v852, 1e-07
        %v857 = vrcp.pop %v855
        %v858 = vmul.f32 1.0, %v857
        %v859 = vrcp.pop %v856
        %v860 = vmul.f32 1.0, %v859
        %v861 = vsel %vm853, %v858, 1.0
        %v862 = vsel %vm854, %v860, 1.0
        %v863 = vmul.f32 %v791, %v861
        %v864 = vmul.f32 %v793, %v862
        %v865 = vmul.f32 %v797, %v861
        %v866 = vmul.f32 %v799, %v862
        %v867 = vmul.f32 %v803, %v861
        %v868 = vmul.f32 %v805, %v862
        %v869 = vmul.f32 %v809, %v861
        %v870 = vmul.f32 %v811, %v862
        %v871 = vld [vmem:[#allocation8] sm:$0xff]
        %v872 = vld [vmem:[#allocation8 + $0x8] sm:$0xff]
        %v873 = vld [vmem:[#allocation8 + $0x10] sm:$0xff]
        %v874 = vld [vmem:[#allocation8 + $0x18] sm:$0xff]
        %v875 = vld [vmem:[%s5] sm:$0xff]
        %v876 = vld [vmem:[%s5 + $0x8] sm:$0xff]
        %v877 = vld [vmem:[%s5 + $0x10] sm:$0xff]
        %v878 = vld [vmem:[%s5 + $0x18] sm:$0xff]
        %880 = vset.pattern.permute.xlu0 0
        %881 = vperm.xlu0 %880, %v875
        %v882 = vpop.permute.xlu0 %881
        %885 = vset.pattern.permute.xlu0 0
        %886 = vperm.xlu0 %885, %v876
        %v887 = vpop.permute.xlu0 %886
        %890 = vset.pattern.permute.xlu0 0
        %891 = vperm.xlu0 %890, %v877
        %v892 = vpop.permute.xlu0 %891
        %895 = vset.pattern.permute.xlu0 0
        %896 = vperm.xlu0 %895, %v878
        %v897 = vpop.permute.xlu0 %896
        %v900 = vsel %vm486, %v871, 0
        %v903 = vsel %vm486, %v872, 0
        %v906 = vsel %vm486, %v873, 0
        %v909 = vsel %vm486, %v874, 0
        %911 = vmatprep.subr.mxu0 %v639
        %912 = vmatpush1.msra.mxu0 %v638
        %913 = vmatprep.subr.mxu0 %v641
        %914 = vmatpush1.msra.mxu0 %v640
        %915 = vmatprep.subr.mxu0 %v643
        %916 = vmatpush1.msra.mxu0 %v642
        %917 = vmatprep.subr.mxu0 %v645
        %918 = vmatpush1.msra.mxu0 %v644
        %919 = vmatprep.subr.mxu0 %v864
        %920 = vmatpush1.msra.mxu0 %v863
        %921 = vmatprep.subr.mxu0 %v866
        %922 = vmatpush1.msra.mxu0 %v865
        %923 = vmatprep.subr.mxu0 %v868
        %924 = vmatpush1.msra.mxu0 %v867
        %925 = vmatprep.subr.mxu0 %v870
        %926 = vmatpush1.msra.mxu0 %v869
        %927 = vmatprep.subr.mxu0 0.0
        %928 = vmatpush1.msra.mxu0 0.0
        %929 = vmatprep.subr.mxu0 0.0
        %930 = vmatpush1.msra.mxu0 0.0
        %931 = vmatprep.subr.mxu0 0.0
        %932 = vmatpush1.msra.mxu0 0.0
        %933 = vmatprep.subr.mxu0 0.0
        %934 = vmatpush1.msra.mxu0 0.0
        %935 = vmatprep.subr.mxu0 0.0
        %936 = vmatpush1.msra.mxu0 0.0
        %937 = vmatprep.subr.mxu0 0.0
        %938 = vmatpush1.msra.mxu0 0.0
        %939 = vmatprep.subr.mxu0 0.0
        %940 = vmatpush1.msra.mxu0 0.0
        %941 = vmatprep.subr.mxu0 0.0
        %942 = vmatpush1.msra.mxu0 0.0
        %943 = vmatprep.subr.mxu0 0.0
        %944 = vmatpush1.msra.mxu0 0.0
        %945 = vmatprep.subr.mxu0 0.0
        %946 = vmatpush1.msra.mxu0 0.0
        %947 = vmatprep.subr.mxu0 0.0
        %948 = vmatpush1.msra.mxu0 0.0
        %949 = vmatprep.subr.mxu0 0.0
        %950 = vmatpush1.msra.mxu0 0.0
        %951 = vmatprep.subr.mxu0 0.0
        %952 = vmatpush1.msra.mxu0 0.0
        %953 = vmatprep.subr.mxu0 0.0
        %954 = vmatpush1.msra.mxu0 0.0
        %955 = vmatprep.subr.mxu0 0.0
        %956 = vmatpush1.msra.mxu0 0.0
        %957 = vmatprep.subr.mxu0 0.0
        %958 = vmatpush1.msra.mxu0 0.0
        %959 = vmatprep.subr.mxu0 0.0
        %960 = vmatpush1.msra.mxu0 0.0
        %961 = vmatprep.subr.mxu0 0.0
        %962 = vmatpush1.msra.mxu0 0.0
        %963 = vmatprep.subr.mxu0 0.0
        %964 = vmatpush1.msra.mxu0 0.0
        %965 = vmatprep.subr.mxu0 0.0
        %966 = vmatpush1.msra.mxu0 0.0
        %967 = vmatprep.subr.mxu0 0.0
        %968 = vmatpush1.msra.mxu0 0.0
        %969 = vmatprep.subr.mxu0 0.0
        %970 = vmatpush1.msra.mxu0 0.0
        %971 = vmatprep.subr.mxu0 0.0
        %972 = vmatpush1.msra.mxu0 0.0
        %973 = vmatprep.subr.mxu0 0.0
        %974 = vmatpush1.msra.mxu0 0.0
        %975 = vmatprep.mubr.f32.mxu0 0.0
        %976 = vmatmul.mubr.f32.gmra.mrb[0].mxu0 %v900
        %v977 = vpop.f32.mrb[0].mxu0
        %v978 = vadd.f32 %v882, %v977
        %v979 = vpop.f32.mrb[0].mxu0
        %v980 = vadd.f32 %v882, %v979
        %981 = vmatprep.mubr.f32.mxu0 0.0
        %982 = vmatmul.mubr.f32.gmra.mrb[0].mxu0 %v903
        %v983 = vpop.f32.mrb[0].mxu0
        %v984 = vadd.f32 %v887, %v983
        %v985 = vpop.f32.mrb[0].mxu0
        %v986 = vadd.f32 %v887, %v985
        %987 = vmatprep.mubr.f32.mxu0 0.0
        %988 = vmatmul.mubr.f32.gmra.mrb[0].mxu0 %v906
        %v989 = vpop.f32.mrb[0].mxu0
        %v990 = vadd.f32 %v892, %v989
        %v991 = vpop.f32.mrb[0].mxu0
        %v992 = vadd.f32 %v892, %v991
        %993 = vmatprep.mubr.f32.mxu0 0.0
        %994 = vmatmul.mubr.f32.gmra.mrb[0].mxu0 %v909
        %v995 = vpop.f32.mrb[0].mxu0
        %v996 = vadd.f32 %v897, %v995
        %v997 = vpop.f32.mrb[0].mxu0
        %v998 = vadd.f32 %v897, %v997
        %999 = vdwg.mxu0
        %v1000 = vtanh.pop %v978
        %v1001 = vtanh.pop %v980
        %v1002 = vtanh.pop %v984
        %v1003 = vtanh.pop %v986
        %v1004 = vtanh.pop %v990
        %v1005 = vtanh.pop %v992
        %v1006 = vtanh.pop %v996
        %v1007 = vtanh.pop %v998
        %v1008 = vld [vmem:[%s6] sm:$0xff]
        %v1009 = vld [vmem:[%s6 + $0x8] sm:$0xff]
        %v1010 = vld [vmem:[%s7] sm:$0xff]
        %v1011 = vld [vmem:[%s7 + $0x8] sm:$0xff]
        %1013 = vset.pattern.permute.xlu0 0
        %1014 = vperm.xlu0 %1013, %v1010
        %v1015 = vpop.permute.xlu0 %1014
        %1018 = vset.pattern.permute.xlu0 0
        %1019 = vperm.xlu0 %1018, %v1011
        %v1020 = vpop.permute.xlu0 %1019
        %vm1022 = vcmask 261120
        %v1024 = vsel %vm1022, %v1008, 0
        %v1027 = vsel %vm1022, %v1009, 0
        %1029 = vmatprep.subr.mxu0 %v1001
        %1030 = vmatpush1.msra.mxu0 %v1000
        %1031 = vmatprep.subr.mxu0 %v1003
        %1032 = vmatpush1.msra.mxu0 %v1002
        %1033 = vmatprep.subr.mxu0 %v1005
        %1034 = vmatpush1.msra.mxu0 %v1004
        %1035 = vmatprep.subr.mxu0 %v1007
        %1036 = vmatpush1.msra.mxu0 %v1006
        %1037 = vmatprep.subr.mxu0 0.0
        %1038 = vmatpush1.msra.mxu0 0.0
        %1039 = vmatprep.subr.mxu0 0.0
        %1040 = vmatpush1.msra.mxu0 0.0
        %1041 = vmatprep.subr.mxu0 0.0
        %1042 = vmatpush1.msra.mxu0 0.0
        %1043 = vmatprep.subr.mxu0 0.0
        %1044 = vmatpush1.msra.mxu0 0.0
        %1045 = vmatprep.subr.mxu0 0.0
        %1046 = vmatpush1.msra.mxu0 0.0
        %1047 = vmatprep.subr.mxu0 0.0
        %1048 = vmatpush1.msra.mxu0 0.0
        %1049 = vmatprep.subr.mxu0 0.0
        %1050 = vmatpush1.msra.mxu0 0.0
        %1051 = vmatprep.subr.mxu0 0.0
        %1052 = vmatpush1.msra.mxu0 0.0
        %1053 = vmatprep.subr.mxu0 0.0
        %1054 = vmatpush1.msra.mxu0 0.0
        %1055 = vmatprep.subr.mxu0 0.0
        %1056 = vmatpush1.msra.mxu0 0.0
        %1057 = vmatprep.subr.mxu0 0.0
        %1058 = vmatpush1.msra.mxu0 0.0
        %1059 = vmatprep.subr.mxu0 0.0
        %1060 = vmatpush1.msra.mxu0 0.0
        %1061 = vmatprep.subr.mxu0 0.0
        %1062 = vmatpush1.msra.mxu0 0.0
        %1063 = vmatprep.subr.mxu0 0.0
        %1064 = vmatpush1.msra.mxu0 0.0
        %1065 = vmatprep.subr.mxu0 0.0
        %1066 = vmatpush1.msra.mxu0 0.0
        %1067 = vmatprep.subr.mxu0 0.0
        %1068 = vmatpush1.msra.mxu0 0.0
        %1069 = vmatprep.subr.mxu0 0.0
        %1070 = vmatpush1.msra.mxu0 0.0
        %1071 = vmatprep.subr.mxu0 0.0
        %1072 = vmatpush1.msra.mxu0 0.0
        %1073 = vmatprep.subr.mxu0 0.0
        %1074 = vmatpush1.msra.mxu0 0.0
        %1075 = vmatprep.subr.mxu0 0.0
        %1076 = vmatpush1.msra.mxu0 0.0
        %1077 = vmatprep.subr.mxu0 0.0
        %1078 = vmatpush1.msra.mxu0 0.0
        %1079 = vmatprep.subr.mxu0 0.0
        %1080 = vmatpush1.msra.mxu0 0.0
        %1081 = vmatprep.subr.mxu0 0.0
        %1082 = vmatpush1.msra.mxu0 0.0
        %1083 = vmatprep.subr.mxu0 0.0
        %1084 = vmatpush1.msra.mxu0 0.0
        %1085 = vmatprep.subr.mxu0 0.0
        %1086 = vmatpush1.msra.mxu0 0.0
        %1087 = vmatprep.subr.mxu0 0.0
        %1088 = vmatpush1.msra.mxu0 0.0
        %1089 = vmatprep.subr.mxu0 0.0
        %1090 = vmatpush1.msra.mxu0 0.0
        %1091 = vmatprep.subr.mxu0 0.0
        %1092 = vmatpush1.msra.mxu0 0.0
        %1093 = vmatprep.mubr.f32.mxu0 0.0
        %1094 = vmatmul.mubr.f32.gmra.mrb[0].mxu0 %v1024
        %v1095 = vpop.f32.mrb[0].mxu0
        %v1096 = vadd.f32 %v1015, %v1095
        %v1097 = vpop.f32.mrb[0].mxu0
        %v1098 = vadd.f32 %v1015, %v1097
        %1099 = vmatprep.mubr.f32.mxu0 0.0
        %1100 = vmatmul.mubr.f32.gmra.mrb[0].mxu0 %v1027
        %v1101 = vpop.f32.mrb[0].mxu0
        %v1102 = vadd.f32 %v1020, %v1101
        %v1103 = vpop.f32.mrb[0].mxu0
        %v1104 = vadd.f32 %v1020, %v1103
        %1105 = vdwg.mxu0
        %v1106 = vtanh.pop %v1096
        %v1107 = vtanh.pop %v1098
        %v1108 = vtanh.pop %v1102
        %v1109 = vtanh.pop %v1104
        %v1110 = vld [vmem:[%s8] sm:$0xff]
        %v1111 = vld [vmem:[%s8 + $0x8] sm:$0xff]
        %1113 = vset.pattern.permute.xlu0 0
        %1114 = vperm.xlu0 %1113, %v1110
        %v1115 = vpop.permute.xlu0 %1114
        %1118 = vset.pattern.permute.xlu0 0
        %1119 = vperm.xlu0 %1118, %v1111
        %v1120 = vpop.permute.xlu0 %1119
        %v1122 = vmul.f32 %v1106, %v1115
        %v1123 = vmul.f32 %v1107, %v1115
        %v1124 = vmul.f32 %v1108, %v1120
        %v1125 = vmul.f32 %v1109, %v1120
        %v1126 = vadd.f32 %v1122, %v1124
        %v1127 = vrot.slane %v1126, 4
        %v1128 = vadd.f32 %v1126, %v1127
        %v1129 = vrot.slane %v1128, 2
        %v1130 = vadd.f32 %v1128, %v1129
        %v1131 = vrot.slane %v1130, 1
        %v1132 = vadd.f32 %v1130, %v1131
        %v1133 = vadd.f32 %v1123, %v1125
        %v1134 = vrot.slane %v1133, 4
        %v1135 = vadd.f32 %v1133, %v1134
        %v1136 = vrot.slane %v1135, 2
        %v1137 = vadd.f32 %v1135, %v1136
        %v1138 = vrot.slane %v1137, 1
        %v1139 = vadd.f32 %v1137, %v1138
        %s1140 = sld [smem:[#allocation2]]
        %v1141 = vstv %s1140
        %v1142 = vadd.f32 %v1132, %v1141
        %v1143 = vadd.f32 %v1139, %v1141
        %v1144 = vtanh.pop %v1142
        %v1145 = vtanh.pop %v1143
        %v1146 = vxor.u32 %v1144, 2147483648
        %v1147 = vxor.u32 %v1145, 2147483648
        %v1148 = vmul.f32 %v1146, 1.442695
        %v1149 = vpow.pop %v1148
        %v1150 = vmul.f32 %v1147, 1.442695
        %v1151 = vpow.pop %v1150
        %v1152 = vadd.f32 %v1149, 1.0
        %v1153 = vadd.f32 %v1151, 1.0
        %v1154 = vrcp.pop %v1152
        %v1155 = vmul.f32 1.0, %v1154
        %v1156 = vrcp.pop %v1153
        %v1157 = vmul.f32 1.0, %v1156
        %v1160 = vcombine.low %v1155, %v1157
        %v1162 = vunpack.c.l.s4 1966171168
        %v1163 = vunpack.c.0.s8 %v1162
        %v1164 = vlaneseq
        %v1165 = vshrl.u32 %v1164, 7
        %v1166 = vsub.s32 %v1163, %v1165
        %v1167 = vrot.slane %v1160, %v1166
        %v1169 = vunpack.c.l.s4 1966171168
        %v1170 = vunpack.c.0.s8 %v1169
        %v1171 = vlaneseq
        %v1172 = vshrl.u32 %v1171, 7
        %v1173 = vsub.s32 %v1170, %v1172
        %v1174 = vrot.slane %v1167, %v1173
        %v1176 = vlaneseq
        %vm1177 = vcmp.ge.s32.totalorder %v1176, 0
        %vm1178 = vcmp.lt.s32.totalorder %v1176, 256
        %vm1179 = vmand %vm1177, %vm1178
        %1180 = vst.msk [vmem:[%s428] sm:$0x3] %vm1179, %v1174
        %s1181 = sand.u32 %s259, 1
        %s1182 = scalar_lea.sflag [#allocation5], %s1181
        %s1183 = sand.u32 %s259, 1
        %s1184 = smul.addr %s1183, 2
        %s1185 = scalar_lea.vmem [#allocation9], %s1184
        // Predicated region
        $region73: #{tpu_custom_call.1} parent=59 // pred_check
          %p1186 = pneg %p269
        $region74: #{tpu_custom_call.1} parent=59 // pred_check_branch
          %1188 = sbr.rel (%p1186) target = $region76
        $region75: #{tpu_custom_call.1} parent=59 // pred_region
          %s1189 = smul.u32 2, %s31
          %s1191 = ssub.s32 32, 32
          %1192 = vsyncadd %s1182, %s1191
          %s1193 = smul.addr %s1189, 16
          %s1194 = scalar_lea.hbm %s10, %s1193
          %s1196 = sshll.u32 %s1185, 4
          %s1197 = int_to_ptr.vmem [resolvable:$true] %s1196
          %1199 = dma.vmem_to_hbm [thread:$0]  %s1197, 32, %s1194, %s1182
        $region76: #{tpu_custom_call.1} parent=59 // pred_fallthru
          _
      $region60: #{tpu_custom_call.1} parent=5 // pred_fallthru
        _
      %p1200 = scmp.le.s32.totalorder 2, %s26
      // Predicated region
      $region77: #{tpu_custom_call.1} parent=5 // pred_check
        %p1201 = pneg %p1200
      $region78: #{tpu_custom_call.1} parent=5 // pred_check_branch
        %1203 = sbr.rel (%p1201) target = $region80
      $region79: #{tpu_custom_call.1} parent=5 // pred_region
        %s1204 = ssub.s32 %s26, 2
        // Predicated region
        $region81: #{tpu_custom_call.1} parent=79 // pred_check
          %p1205 = pneg %p275
        $region82: #{tpu_custom_call.1} parent=79 // pred_check_branch
          %1207 = sbr.rel (%p1205) target = $region84
        $region83: #{tpu_custom_call.1} parent=79 // pred_region
          %s1208 = sand.u32 %s260, 1
          %s1209 = scalar_lea.sflag [#allocation5], %s1208
          %s1210 = sand.u32 %s260, 1
          %s1211 = smul.addr %s1210, 2
          %s1212 = scalar_lea.vmem [#allocation9], %s1211
          %1213 = dma.done %s1209, 32
        $region84: #{tpu_custom_call.1} parent=79 // pred_fallthru
          _
      $region80: #{tpu_custom_call.1} parent=5 // pred_fallthru
        _
    $region6: #{tpu_custom_call.1} parent=1 // loop_footer
      %s30 = sadd.s32 1, %s26
    $region7: #{tpu_custom_call.1} parent=1 // loop_footer_branch
      %25 = sbr.rel target = $region3
    $region8: #{tpu_custom_call.1} parent=1 // loop_exit
      _
    %1214 = vsyncpa [#allocation4], 1
    %s1215 = scalar_lea.sflag [#allocation4], 1
    %1216 = vsyncpa %s1215, 1
    %1217 = vsyncpa [#allocation7], 1
    %s1218 = scalar_lea.sflag [#allocation7], 1
    %1219 = vsyncpa %s1218, 1
    %1220 = vsyncpa [#allocation5], 1
    %s1221 = scalar_lea.sflag [#allocation5], 1
    %1222 = vsyncpa %s1221, 1

</llo_original>
